<compile_context>
chip_gen: v7x
topology: tpu7x:2x2x1
jax: 0.10.0
libtpu: 0.0.40
codegen_flags: <defaults>
</compile_context>

<pallas_src>
import jax
import jax.numpy as jnp
from jax.experimental import pallas as pl
from jax.experimental.pallas import tpu as pltpu


def _round_up(n, m):
    return ((n + m - 1) // m) * m


# ---------------------------------------------------------------------------
# Kernel
# ---------------------------------------------------------------------------
def mlp_kernel(x_ref,
               w1_ref, b1_ref,
               w2_ref, b2_ref,
               w3_ref, b3_ref,
               w4_ref, b4_ref,
               o_ref):
    """One batch tile: four fused (matmul + bias [+ ReLU]) layers, all in VMEM.

    x arrives already in the MXU input dtype (bf16); bias adds / ReLU /
    accumulation stay in f32 (v5e has no bf16 VPU).
    """
    cdt = w1_ref.dtype  # MXU input dtype (bf16)

    h = jnp.dot(x_ref[...], w1_ref[...],
                preferred_element_type=jnp.float32) + b1_ref[...]
    h = jnp.maximum(h, 0.0)                                    # relu1 (f32 VPU)

    h = jnp.dot(h.astype(cdt), w2_ref[...],
                preferred_element_type=jnp.float32) + b2_ref[...]
    h = jnp.maximum(h, 0.0)                                    # relu2

    h = jnp.dot(h.astype(cdt), w3_ref[...],
                preferred_element_type=jnp.float32) + b3_ref[...]
    h = jnp.maximum(h, 0.0)                                    # relu3

    out = jnp.dot(h.astype(cdt), w4_ref[...],
                  preferred_element_type=jnp.float32) + b4_ref[...]

    o_ref[...] = out.astype(o_ref.dtype)


# ---------------------------------------------------------------------------
# Host-side helpers
# ---------------------------------------------------------------------------
def _tpu_env():
    """Best-effort (VMEM capacity bytes, is_v7x). Conservative fallbacks."""
    kind = ""
    try:
        kind = jax.devices()[0].device_kind.lower()
    except Exception:
        pass
    vmem = None
    try:
        vmem = int(pltpu.get_tpu_info().vmem_capacity_bytes)
    except Exception:
        vmem = None
    if vmem is None or vmem <= 0:
        vmem = 64 << 20  # conservative: v7x per-TensorCore VMEM
    return vmem, ("v7" in kind)


def _pick_batch_tile(B, batch_tile, is_v7x):
    if batch_tile is not None:
        tb = batch_tile
    elif is_v7x:
        # >= 4 grid steps so each of the 2 TCs gets >= 2 steps to pipeline.
        tb = min(512, pl.cdiv(B, 4))
    else:
        # Single TensorCore: one big step for small batches, else 512-row tiles
        # (~85% of HBM roofline per measured tiled-copy data).
        tb = B if B <= 1024 else 512
    tb = max(8, _round_up(tb, 8))
    return tb


def prepare_params(params, weights_dtype=jnp.bfloat16):
    """Pad + cast weights/biases ONCE (cache outside the per-call path).

    params: dict with w1..w4 stored as [in, out] and b1..b4 as [1, out].
    Only the hidden dim is lane-padded (to 128); the true input_dim / output_dim
    are kept so x / output DMAs stay at their real width.
    """
    input_dim = params["w1"].shape[0]
    hidden_dim = params["w1"].shape[1]
    output_dim = params["w4"].shape[1]
    hid_p = _round_up(hidden_dim, 128)

    def pad_w(w, rp, cp):
        return jnp.pad(w, ((0, rp - w.shape[0]), (0, cp - w.shape[1]))).astype(weights_dtype)

    def pad_b(b, cp):
        return jnp.pad(b, ((0, 0), (0, cp - b.shape[1]))).astype(jnp.float32)

    prepared = {
        "w1": pad_w(params["w1"], input_dim, hid_p), "b1": pad_b(params["b1"], hid_p),
        "w2": pad_w(params["w2"], hid_p, hid_p),     "b2": pad_b(params["b2"], hid_p),
        "w3": pad_w(params["w3"], hid_p, hid_p),     "b3": pad_b(params["b3"], hid_p),
        "w4": pad_w(params["w4"], hid_p, output_dim), "b4": pad_b(params["b4"], output_dim),
        "input_dim": input_dim, "hidden_dim": hidden_dim, "output_dim": output_dim,
        "weights_dtype": weights_dtype,
    }
    return prepared


def feedforward_forward(x, prepared, *, batch_tile=None):
    """Run the fused MLP Pallas kernel.

    x: [B, input_dim] float32 (cast to bf16 once for streaming).
    prepared: output of prepare_params().
    """
    B, input_dim = x.shape
    assert input_dim == prepared["input_dim"]
    output_dim = prepared["output_dim"]
    weights_dtype = prepared["weights_dtype"]

    vmem_cap, is_v7x = _tpu_env()

    tb = _pick_batch_tile(B, batch_tile, is_v7x)
    B_pad = _round_up(B, tb)
    grid = (B_pad // tb,)

    # Stream x in the MXU input dtype (halves the only per-step input DMA).
    x_s = x.astype(weights_dtype)
    if B_pad != B:
        x_s = jnp.pad(x_s, ((0, B_pad - B), (0, 0)))

    operands = (prepared["w1"], prepared["b1"],
                prepared["w2"], prepared["b2"],
                prepared["w3"], prepared["b3"],
                prepared["w4"], prepared["b4"])

    # VMEM budget: count the constant-index "resident" weight/bias blocks as
    # double-buffered (Pallas double-buffers inputs per BlockSpec by default),
    # plus the 2-deep streamed x (bf16) / o (f32) tiles.
    resident_bytes = sum(int(t.size) * t.dtype.itemsize for t in operands)
    stream_bytes = 2 * (tb * input_dim * x_s.dtype.itemsize
                        + tb * output_dim * 4)
    needed = 2 * resident_bytes + stream_bytes
    vmem_ceiling = vmem_cap - (12 << 20)  # >= 12 MiB headroom for Mosaic scratch
    if needed > vmem_ceiling:
        raise ValueError(
            f"resident weight set + tiles ({needed} B) exceed VMEM budget "
            f"({vmem_ceiling} B); tile the hidden dim instead")
    vmem_limit = int(min(max(needed + (8 << 20), 32 << 20), vmem_ceiling))

    def full_block(arr):
        # Full (untiled) block, resident in VMEM across all grid steps.
        return pl.BlockSpec(arr.shape, lambda i: (0, 0))

    # x / o blocks keep their true last dim (== full array dim, so legal even
    # when not a multiple of 128); batch tile is a multiple of 8.
    in_specs = [pl.BlockSpec((tb, input_dim), lambda i: (i, 0))]
    in_specs += [full_block(t) for t in operands]
    out_specs = pl.BlockSpec((tb, output_dim), lambda i: (i, 0))

    out_padded = pl.pallas_call(
        mlp_kernel,
        out_shape=jax.ShapeDtypeStruct((B_pad, output_dim), jnp.float32),
        grid_spec=pltpu.PrefetchScalarGridSpec(
            num_scalar_prefetch=0,
            grid=grid,
            in_specs=in_specs,
            out_specs=out_specs,
        ),
        compiler_params=pltpu.CompilerParams(
            dimension_semantics=("parallel",),   # batch axis -> megacore on v7x
            vmem_limit_bytes=vmem_limit,
        ),
    )(x_s, *operands)

    if B_pad != B:
        out_padded = out_padded[:B]
    return out_padded.astype(x.dtype)


# ---------------------------------------------------------------------------
# Init + references
# ---------------------------------------------------------------------------
def init_params(key, input_dim, hidden_dim, output_dim):
    """Deterministic init mirroring nn.Linear's U(-1/sqrt(fan_in), 1/sqrt(fan_in))."""
    dims = [(input_dim, hidden_dim),
            (hidden_dim, hidden_dim),
            (hidden_dim, hidden_dim),
            (hidden_dim, output_dim)]
    params = {}
    for idx, (fan_in, fan_out) in enumerate(dims, start=1):
        key, kw, kb = jax.random.split(key, 3)
        bound = 1.0 / jnp.sqrt(jnp.float32(fan_in))
        # Stored as [in, out] (transpose of PyTorch's [out, in]).
        params[f"w{idx}"] = jax.random.uniform(
            kw, (fan_in, fan_out), jnp.float32, minval=-bound, maxval=bound)
        params[f"b{idx}"] = jax.random.uniform(
            kb, (1, fan_out), jnp.float32, minval=-bound, maxval=bound)
    return params


def reference_forward(x, params):
    """Plain-JAX f32 reference identical to the PyTorch forward semantics."""
    h = jnp.maximum(x @ params["w1"] + params["b1"], 0.0)
    h = jnp.maximum(h @ params["w2"] + params["b2"], 0.0)
    h = jnp.maximum(h @ params["w3"] + params["b3"], 0.0)
    return h @ params["w4"] + params["b4"]


def reference_forward_mixed(x, params, weights_dtype=jnp.bfloat16):
    """Reference mirroring the kernel's precision: bf16 MXU inputs, f32 accumulation."""
    def lin(h, w, b):
        return jnp.dot(h.astype(weights_dtype), w.astype(weights_dtype),
                       preferred_element_type=jnp.float32) + b.astype(jnp.float32)
    h = jnp.maximum(lin(x, params["w1"], params["b1"]), 0.0)
    h = jnp.maximum(lin(h, params["w2"], params["b2"]), 0.0)
    h = jnp.maximum(lin(h, params["w3"], params["b3"]), 0.0)
    return lin(h, params["w4"], params["b4"])


# ---------------------------------------------------------------------------
if __name__ == "__main__":
    key = jax.random.PRNGKey(0)

    batch = 512
    input_dim = 32
    hidden_dim = 64
    output_dim = 16

    key, kx, kp = jax.random.split(key, 3)
    x = jax.random.normal(kx, (batch, input_dim), dtype=jnp.float32)
    params = init_params(kp, input_dim, hidden_dim, output_dim)

    prepared = prepare_params(params)          # pad/cast weights ONCE
    out = feedforward_forward(x, prepared)
    out = jax.block_until_ready(out)
    assert out.shape == (batch, output_dim)

    # Tight check against a reference using the same mixed precision as the kernel.
    ref_mixed = reference_forward_mixed(x, params)
    assert jnp.allclose(out, ref_mixed, atol=1e-2, rtol=1e-2), \
        "mismatch vs mixed-precision reference"

    # Loose check against the pure-f32 PyTorch-equivalent forward (bf16 rounding).
    ref_f32 = reference_forward(x, params)
    assert jnp.allclose(out, ref_f32, atol=5e-2, rtol=5e-2), "mismatch vs f32 reference"

    print("KERNEL_OK")
</pallas_src>

<mosaic_0001>
module attributes {stable_mosaic.version = 11 : i64} {
  func.func @mlp_kernel(%arg0: i32, %arg1: memref<512x32xbf16, #tpu.memory_space<vmem>>, %arg2: memref<32x128xbf16, #tpu.memory_space<vmem>>, %arg3: memref<1x128xf32, #tpu.memory_space<vmem>>, %arg4: memref<128x128xbf16, #tpu.memory_space<vmem>>, %arg5: memref<1x128xf32, #tpu.memory_space<vmem>>, %arg6: memref<128x128xbf16, #tpu.memory_space<vmem>>, %arg7: memref<1x128xf32, #tpu.memory_space<vmem>>, %arg8: memref<128x16xbf16, #tpu.memory_space<vmem>>, %arg9: memref<1x16xf32, #tpu.memory_space<vmem>>, %arg10: memref<512x16xf32, #tpu.memory_space<vmem>>) attributes {dimension_semantics = [#tpu.dimension_semantics<parallel>], iteration_bounds = array<i64: 1>, scalar_prefetch = 0 : i64, scratch_operands = 0 : i64, tpu.core_type = #tpu.core_type<tc>, window_params = [{transform_indices = @transform_0, window_bounds = array<i64: 512, 32>}, {pipeline_mode = #tpu.pipeline_mode<synchronous>, transform_indices = @transform_1, window_bounds = array<i64: 32, 128>}, {pipeline_mode = #tpu.pipeline_mode<synchronous>, transform_indices = @transform_2, window_bounds = array<i64: 1, 128>}, {pipeline_mode = #tpu.pipeline_mode<synchronous>, transform_indices = @transform_3, window_bounds = array<i64: 128, 128>}, {pipeline_mode = #tpu.pipeline_mode<synchronous>, transform_indices = @transform_4, window_bounds = array<i64: 1, 128>}, {pipeline_mode = #tpu.pipeline_mode<synchronous>, transform_indices = @transform_5, window_bounds = array<i64: 128, 128>}, {pipeline_mode = #tpu.pipeline_mode<synchronous>, transform_indices = @transform_6, window_bounds = array<i64: 1, 128>}, {pipeline_mode = #tpu.pipeline_mode<synchronous>, transform_indices = @transform_7, window_bounds = array<i64: 128, 16>}, {pipeline_mode = #tpu.pipeline_mode<synchronous>, transform_indices = @transform_8, window_bounds = array<i64: 1, 16>}, {transform_indices = @transform_9, window_bounds = array<i64: 512, 16>}]} {
    %c0 = arith.constant 0 : index
    %c0_0 = arith.constant 0 : index
    %0 = vector.load %arg1[%c0, %c0_0] : memref<512x32xbf16, #tpu.memory_space<vmem>>, vector<512x32xbf16>
    %c0_1 = arith.constant 0 : index
    %c0_2 = arith.constant 0 : index
    %1 = vector.load %arg2[%c0_1, %c0_2] : memref<32x128xbf16, #tpu.memory_space<vmem>>, vector<32x128xbf16>
    %cst = arith.constant dense<0.000000e+00> : vector<512x128xf32>
    %2 = tpu.matmul %0, %1, %cst {dimension_numbers = #tpu.dot_dimension_numbers<[1], [0], [0], [1], [0, 0, 1, 1], [], []>} : vector<512x32xbf16>, vector<32x128xbf16>, vector<512x128xf32> -> vector<512x128xf32>
    %c0_3 = arith.constant 0 : index
    %c0_4 = arith.constant 0 : index
    %3 = vector.load %arg3[%c0_3, %c0_4] : memref<1x128xf32, #tpu.memory_space<vmem>>, vector<1x128xf32>
    %4 = vector.broadcast %3 : vector<1x128xf32> to vector<512x128xf32>
    %5 = arith.addf %2, %4 : vector<512x128xf32>
    %cst_5 = arith.constant 0.000000e+00 : f32
    %6 = vector.broadcast %cst_5 : f32 to vector<512x128xf32>
    %7 = arith.maximumf %5, %6 : vector<512x128xf32>
    %8 = arith.truncf %7 : vector<512x128xf32> to vector<512x128xbf16>
    %c0_6 = arith.constant 0 : index
    %c0_7 = arith.constant 0 : index
    %9 = vector.load %arg4[%c0_6, %c0_7] : memref<128x128xbf16, #tpu.memory_space<vmem>>, vector<128x128xbf16>
    %cst_8 = arith.constant dense<0.000000e+00> : vector<512x128xf32>
    %10 = tpu.matmul %8, %9, %cst_8 {dimension_numbers = #tpu.dot_dimension_numbers<[1], [0], [0], [1], [0, 0, 1, 1], [], []>} : vector<512x128xbf16>, vector<128x128xbf16>, vector<512x128xf32> -> vector<512x128xf32>
    %c0_9 = arith.constant 0 : index
    %c0_10 = arith.constant 0 : index
    %11 = vector.load %arg5[%c0_9, %c0_10] : memref<1x128xf32, #tpu.memory_space<vmem>>, vector<1x128xf32>
    %12 = vector.broadcast %11 : vector<1x128xf32> to vector<512x128xf32>
    %13 = arith.addf %10, %12 : vector<512x128xf32>
    %cst_11 = arith.constant 0.000000e+00 : f32
    %14 = vector.broadcast %cst_11 : f32 to vector<512x128xf32>
    %15 = arith.maximumf %13, %14 : vector<512x128xf32>
    %16 = arith.truncf %15 : vector<512x128xf32> to vector<512x128xbf16>
    %c0_12 = arith.constant 0 : index
    %c0_13 = arith.constant 0 : index
    %17 = vector.load %arg6[%c0_12, %c0_13] : memref<128x128xbf16, #tpu.memory_space<vmem>>, vector<128x128xbf16>
    %cst_14 = arith.constant dense<0.000000e+00> : vector<512x128xf32>
    %18 = tpu.matmul %16, %17, %cst_14 {dimension_numbers = #tpu.dot_dimension_numbers<[1], [0], [0], [1], [0, 0, 1, 1], [], []>} : vector<512x128xbf16>, vector<128x128xbf16>, vector<512x128xf32> -> vector<512x128xf32>
    %c0_15 = arith.constant 0 : index
    %c0_16 = arith.constant 0 : index
    %19 = vector.load %arg7[%c0_15, %c0_16] : memref<1x128xf32, #tpu.memory_space<vmem>>, vector<1x128xf32>
    %20 = vector.broadcast %19 : vector<1x128xf32> to vector<512x128xf32>
    %21 = arith.addf %18, %20 : vector<512x128xf32>
    %cst_17 = arith.constant 0.000000e+00 : f32
    %22 = vector.broadcast %cst_17 : f32 to vector<512x128xf32>
    %23 = arith.maximumf %21, %22 : vector<512x128xf32>
    %24 = arith.truncf %23 : vector<512x128xf32> to vector<512x128xbf16>
    %c0_18 = arith.constant 0 : index
    %c0_19 = arith.constant 0 : index
    %25 = vector.load %arg8[%c0_18, %c0_19] : memref<128x16xbf16, #tpu.memory_space<vmem>>, vector<128x16xbf16>
    %cst_20 = arith.constant dense<0.000000e+00> : vector<512x16xf32>
    %26 = tpu.matmul %24, %25, %cst_20 {dimension_numbers = #tpu.dot_dimension_numbers<[1], [0], [0], [1], [0, 0, 1, 1], [], []>} : vector<512x128xbf16>, vector<128x16xbf16>, vector<512x16xf32> -> vector<512x16xf32>
    %c0_21 = arith.constant 0 : index
    %c0_22 = arith.constant 0 : index
    %27 = vector.load %arg9[%c0_21, %c0_22] : memref<1x16xf32, #tpu.memory_space<vmem>>, vector<1x16xf32>
    %28 = vector.broadcast %27 : vector<1x16xf32> to vector<512x16xf32>
    %29 = arith.addf %26, %28 : vector<512x16xf32>
    %c0_23 = arith.constant 0 : index
    %c0_24 = arith.constant 0 : index
    %30 = vector.load %arg10[%c0_23, %c0_24] : memref<512x16xf32, #tpu.memory_space<vmem>>, vector<512x16xf32>
    tpu.vector_store %arg10[%c0_23, %c0_24], %29 {strides = array<i32>} : memref<512x16xf32, #tpu.memory_space<vmem>>, vector<512x16xf32>,
    return
  }
  func.func @transform_0(%arg0: i32) -> (i32, i32) {
    %c0_i32 = arith.constant 0 : i32
    %c0_i32_0 = arith.constant 0 : i32
    return %arg0, %c0_i32 : i32, i32
  }
  func.func @transform_1(%arg0: i32) -> (i32, i32) {
    %c0_i32 = arith.constant 0 : i32
    %c0_i32_0 = arith.constant 0 : i32
    %c0_i32_1 = arith.constant 0 : i32
    return %c0_i32, %c0_i32_0 : i32, i32
  }
  func.func @transform_2(%arg0: i32) -> (i32, i32) {
    %c0_i32 = arith.constant 0 : i32
    %c0_i32_0 = arith.constant 0 : i32
    %c0_i32_1 = arith.constant 0 : i32
    return %c0_i32, %c0_i32_0 : i32, i32
  }
  func.func @transform_3(%arg0: i32) -> (i32, i32) {
    %c0_i32 = arith.constant 0 : i32
    %c0_i32_0 = arith.constant 0 : i32
    %c0_i32_1 = arith.constant 0 : i32
    return %c0_i32, %c0_i32_0 : i32, i32
  }
  func.func @transform_4(%arg0: i32) -> (i32, i32) {
    %c0_i32 = arith.constant 0 : i32
    %c0_i32_0 = arith.constant 0 : i32
    %c0_i32_1 = arith.constant 0 : i32
    return %c0_i32, %c0_i32_0 : i32, i32
  }
  func.func @transform_5(%arg0: i32) -> (i32, i32) {
    %c0_i32 = arith.constant 0 : i32
    %c0_i32_0 = arith.constant 0 : i32
    %c0_i32_1 = arith.constant 0 : i32
    return %c0_i32, %c0_i32_0 : i32, i32
  }
  func.func @transform_6(%arg0: i32) -> (i32, i32) {
    %c0_i32 = arith.constant 0 : i32
    %c0_i32_0 = arith.constant 0 : i32
    %c0_i32_1 = arith.constant 0 : i32
    return %c0_i32, %c0_i32_0 : i32, i32
  }
  func.func @transform_7(%arg0: i32) -> (i32, i32) {
    %c0_i32 = arith.constant 0 : i32
    %c0_i32_0 = arith.constant 0 : i32
    %c0_i32_1 = arith.constant 0 : i32
    return %c0_i32, %c0_i32_0 : i32, i32
  }
  func.func @transform_8(%arg0: i32) -> (i32, i32) {
    %c0_i32 = arith.constant 0 : i32
    %c0_i32_0 = arith.constant 0 : i32
    %c0_i32_1 = arith.constant 0 : i32
    return %c0_i32, %c0_i32_0 : i32, i32
  }
  func.func @transform_9(%arg0: i32) -> (i32, i32) {
    %c0_i32 = arith.constant 0 : i32
    %c0_i32_0 = arith.constant 0 : i32
    return %arg0, %c0_i32 : i32, i32
  }
}

</mosaic_0001>

<llo_original>
// kernel: tpu_custom_call.1
$region0: #{tpu_custom_call.1}
  #allocation0 [shape = 'u32[]', space=smem, size = 0x4, offset = 0x4, fixed_abs, tag = 'smem constant byte address 0x4 - core index']
  #allocation1 [shape = 'u32[144,128]{1,0:T(1,128)}', space=vmem, size = 0x12000, scoped, tag = 'internal scratch']
  %s0 = inlined_call_operand.vmem [shape: bf16[512,32], index: 0, kind: input, shape index: {}]
  %s1 = inlined_call_operand.vmem [shape: bf16[32,128], index: 1, kind: input, shape index: {}]
  %s2 = inlined_call_operand.vmem [shape: f32[1,128], index: 2, kind: input, shape index: {}]
  %s3 = inlined_call_operand.vmem [shape: bf16[128,128], index: 3, kind: input, shape index: {}]
  %s4 = inlined_call_operand.vmem [shape: f32[1,128], index: 4, kind: input, shape index: {}]
  %s5 = inlined_call_operand.vmem [shape: bf16[128,128], index: 5, kind: input, shape index: {}]
  %s6 = inlined_call_operand.vmem [shape: f32[1,128], index: 6, kind: input, shape index: {}]
  %s7 = inlined_call_operand.vmem [shape: bf16[128,16], index: 7, kind: input, shape index: {}]
  %s8 = inlined_call_operand.vmem [shape: f32[1,16], index: 8, kind: input, shape index: {}]
  %s9 = inlined_call_operand.vmem [shape: f32[512,16], index: 9, kind: output, shape index: {}]
  %s10 = sld [smem:[#allocation0]]
  $region46: #{tpu_custom_call.1} parent=0
    _
  %s12 = ssub.s32 1, %s10
  %s13 = scalar_select 0, %s12, %s10
  // Predicated region
  $region2: #{tpu_custom_call.1} parent=0 // pred_check
    _
  $region3: #{tpu_custom_call.1} parent=0 // pred_check_branch
    %15 = sbr.rel (0) target = $region5
  $region4: #{tpu_custom_call.1} parent=0 // pred_region
    _
  $region5: #{tpu_custom_call.1} parent=0 // pred_fallthru
    _
  // Predicated region
  $region6: #{tpu_custom_call.1} parent=0 // pred_check
    _
  $region7: #{tpu_custom_call.1} parent=0 // pred_check_branch
    %17 = sbr.rel (0) target = $region9
  $region8: #{tpu_custom_call.1} parent=0 // pred_region
    _
  $region9: #{tpu_custom_call.1} parent=0 // pred_fallthru
    _
  // Predicated region
  $region10: #{tpu_custom_call.1} parent=0 // pred_check
    _
  $region11: #{tpu_custom_call.1} parent=0 // pred_check_branch
    %19 = sbr.rel (0) target = $region13
  $region12: #{tpu_custom_call.1} parent=0 // pred_region
    _
  $region13: #{tpu_custom_call.1} parent=0 // pred_fallthru
    _
  // Predicated region
  $region14: #{tpu_custom_call.1} parent=0 // pred_check
    _
  $region15: #{tpu_custom_call.1} parent=0 // pred_check_branch
    %21 = sbr.rel (0) target = $region17
  $region16: #{tpu_custom_call.1} parent=0 // pred_region
    _
  $region17: #{tpu_custom_call.1} parent=0 // pred_fallthru
    _
  // Predicated region
  $region18: #{tpu_custom_call.1} parent=0 // pred_check
    _
  $region19: #{tpu_custom_call.1} parent=0 // pred_check_branch
    %23 = sbr.rel (0) target = $region21
  $region20: #{tpu_custom_call.1} parent=0 // pred_region
    _
  $region21: #{tpu_custom_call.1} parent=0 // pred_fallthru
    _
  // Predicated region
  $region22: #{tpu_custom_call.1} parent=0 // pred_check
    _
  $region23: #{tpu_custom_call.1} parent=0 // pred_check_branch
    %25 = sbr.rel (0) target = $region25
  $region24: #{tpu_custom_call.1} parent=0 // pred_region
    _
  $region25: #{tpu_custom_call.1} parent=0 // pred_fallthru
    _
  // Predicated region
  $region26: #{tpu_custom_call.1} parent=0 // pred_check
    _
  $region27: #{tpu_custom_call.1} parent=0 // pred_check_branch
    %27 = sbr.rel (0) target = $region29
  $region28: #{tpu_custom_call.1} parent=0 // pred_region
    _
  $region29: #{tpu_custom_call.1} parent=0 // pred_fallthru
    _
  // Predicated region
  $region30: #{tpu_custom_call.1} parent=0 // pred_check
    _
  $region31: #{tpu_custom_call.1} parent=0 // pred_check_branch
    %29 = sbr.rel (0) target = $region33
  $region32: #{tpu_custom_call.1} parent=0 // pred_region
    _
  $region33: #{tpu_custom_call.1} parent=0 // pred_fallthru
    _
  // Predicated region
  $region34: #{tpu_custom_call.1} parent=0 // pred_check
    _
  $region35: #{tpu_custom_call.1} parent=0 // pred_check_branch
    %31 = sbr.rel (0) target = $region37
  $region36: #{tpu_custom_call.1} parent=0 // pred_region
    _
  $region37: #{tpu_custom_call.1} parent=0 // pred_fallthru
    _
  %v33 = vld [vmem:[%s0] sm:$0xf]
  %v34 = vld [vmem:[%s0 + $0x4] sm:$0xf]
  %v35 = vld [vmem:[%s0 + $0x8] sm:$0xf]
  %v36 = vld [vmem:[%s0 + $0xc] sm:$0xf]
  %v37 = vld [vmem:[%s0 + $0x10] sm:$0xf]
  %v38 = vld [vmem:[%s0 + $0x14] sm:$0xf]
  %v39 = vld [vmem:[%s0 + $0x18] sm:$0xf]
  %v40 = vld [vmem:[%s0 + $0x1c] sm:$0xf]
  %v41 = vld [vmem:[%s0 + $0x20] sm:$0xf]
  %v42 = vld [vmem:[%s0 + $0x24] sm:$0xf]
  %v43 = vld [vmem:[%s0 + $0x28] sm:$0xf]
  %v44 = vld [vmem:[%s0 + $0x2c] sm:$0xf]
  %v45 = vld [vmem:[%s0 + $0x30] sm:$0xf]
  %v46 = vld [vmem:[%s0 + $0x34] sm:$0xf]
  %v47 = vld [vmem:[%s0 + $0x38] sm:$0xf]
  %v48 = vld [vmem:[%s0 + $0x3c] sm:$0xf]
  %v49 = vld [vmem:[%s0 + $0x40] sm:$0xf]
  %v50 = vld [vmem:[%s0 + $0x44] sm:$0xf]
  %v51 = vld [vmem:[%s0 + $0x48] sm:$0xf]
  %v52 = vld [vmem:[%s0 + $0x4c] sm:$0xf]
  %v53 = vld [vmem:[%s0 + $0x50] sm:$0xf]
  %v54 = vld [vmem:[%s0 + $0x54] sm:$0xf]
  %v55 = vld [vmem:[%s0 + $0x58] sm:$0xf]
  %v56 = vld [vmem:[%s0 + $0x5c] sm:$0xf]
  %v57 = vld [vmem:[%s0 + $0x60] sm:$0xf]
  %v58 = vld [vmem:[%s0 + $0x64] sm:$0xf]
  %v59 = vld [vmem:[%s0 + $0x68] sm:$0xf]
  %v60 = vld [vmem:[%s0 + $0x6c] sm:$0xf]
  %v61 = vld [vmem:[%s0 + $0x70] sm:$0xf]
  %v62 = vld [vmem:[%s0 + $0x74] sm:$0xf]
  %v63 = vld [vmem:[%s0 + $0x78] sm:$0xf]
  %v64 = vld [vmem:[%s0 + $0x7c] sm:$0xf]
  %v65 = vld [vmem:[%s0 + $0x80] sm:$0xf]
  %v66 = vld [vmem:[%s0 + $0x84] sm:$0xf]
  %v67 = vld [vmem:[%s0 + $0x88] sm:$0xf]
  %v68 = vld [vmem:[%s0 + $0x8c] sm:$0xf]
  %v69 = vld [vmem:[%s0 + $0x90] sm:$0xf]
  %v70 = vld [vmem:[%s0 + $0x94] sm:$0xf]
  %v71 = vld [vmem:[%s0 + $0x98] sm:$0xf]
  %v72 = vld [vmem:[%s0 + $0x9c] sm:$0xf]
  %v73 = vld [vmem:[%s0 + $0xa0] sm:$0xf]
  %v74 = vld [vmem:[%s0 + $0xa4] sm:$0xf]
  %v75 = vld [vmem:[%s0 + $0xa8] sm:$0xf]
  %v76 = vld [vmem:[%s0 + $0xac] sm:$0xf]
  %v77 = vld [vmem:[%s0 + $0xb0] sm:$0xf]
  %v78 = vld [vmem:[%s0 + $0xb4] sm:$0xf]
  %v79 = vld [vmem:[%s0 + $0xb8] sm:$0xf]
  %v80 = vld [vmem:[%s0 + $0xbc] sm:$0xf]
  %v81 = vld [vmem:[%s0 + $0xc0] sm:$0xf]
  %v82 = vld [vmem:[%s0 + $0xc4] sm:$0xf]
  %v83 = vld [vmem:[%s0 + $0xc8] sm:$0xf]
  %v84 = vld [vmem:[%s0 + $0xcc] sm:$0xf]
  %v85 = vld [vmem:[%s0 + $0xd0] sm:$0xf]
  %v86 = vld [vmem:[%s0 + $0xd4] sm:$0xf]
  %v87 = vld [vmem:[%s0 + $0xd8] sm:$0xf]
  %v88 = vld [vmem:[%s0 + $0xdc] sm:$0xf]
  %v89 = vld [vmem:[%s0 + $0xe0] sm:$0xf]
  %v90 = vld [vmem:[%s0 + $0xe4] sm:$0xf]
  %v91 = vld [vmem:[%s0 + $0xe8] sm:$0xf]
  %v92 = vld [vmem:[%s0 + $0xec] sm:$0xf]
  %v93 = vld [vmem:[%s0 + $0xf0] sm:$0xf]
  %v94 = vld [vmem:[%s0 + $0xf4] sm:$0xf]
  %v95 = vld [vmem:[%s0 + $0xf8] sm:$0xf]
  %v96 = vld [vmem:[%s0 + $0xfc] sm:$0xf]
  %v97 = vld [vmem:[%s1] sm:$0xf]
  %v98 = vld [vmem:[%s1 + $0x4] sm:$0xf]
  %v99 = vld [vmem:[%s1 + $0x8] sm:$0xf]
  %v100 = vld [vmem:[%s1 + $0xc] sm:$0xf]
  %v101 = vld [vmem:[%s2] sm:$0x1]
  %v103 = vlaneseq
  %v104 = vshrl.u32 %v103, 7
  %v105 = vsub.s32 0, %v104
  %v106 = vrot.slane %v101, %v105
  %v172 = vunpack.c.l.b16 %v33
  %v173 = vunpack.c.l.b16 %v34
  %v174 = vunpack.c.l.b16 %v35
  %v175 = vunpack.c.l.b16 %v36
  %v176 = vunpack.c.l.b16 %v37
  %v177 = vunpack.c.l.b16 %v38
  %v178 = vunpack.c.l.b16 %v39
  %v179 = vunpack.c.l.b16 %v40
  %v180 = vunpack.c.l.b16 %v41
  %v181 = vunpack.c.l.b16 %v42
  %v182 = vunpack.c.l.b16 %v43
  %v183 = vunpack.c.l.b16 %v44
  %v184 = vunpack.c.l.b16 %v45
  %v185 = vunpack.c.l.b16 %v46
  %v186 = vunpack.c.l.b16 %v47
  %v187 = vunpack.c.l.b16 %v48
  %v188 = vunpack.c.l.b16 %v49
  %v189 = vunpack.c.l.b16 %v50
  %v190 = vunpack.c.l.b16 %v51
  %v191 = vunpack.c.l.b16 %v52
  %v192 = vunpack.c.l.b16 %v53
  %v193 = vunpack.c.l.b16 %v54
  %v194 = vunpack.c.l.b16 %v55
  %v195 = vunpack.c.l.b16 %v56
  %v196 = vunpack.c.l.b16 %v57
  %v197 = vunpack.c.l.b16 %v58
  %v198 = vunpack.c.l.b16 %v59
  %v199 = vunpack.c.l.b16 %v60
  %v200 = vunpack.c.l.b16 %v61
  %v201 = vunpack.c.l.b16 %v62
  %v202 = vunpack.c.l.b16 %v63
  %v203 = vunpack.c.l.b16 %v64
  %v204 = vunpack.c.l.b16 %v65
  %v205 = vunpack.c.l.b16 %v66
  %v206 = vunpack.c.l.b16 %v67
  %v207 = vunpack.c.l.b16 %v68
  %v208 = vunpack.c.l.b16 %v69
  %v209 = vunpack.c.l.b16 %v70
  %v210 = vunpack.c.l.b16 %v71
  %v211 = vunpack.c.l.b16 %v72
  %v212 = vunpack.c.l.b16 %v73
  %v213 = vunpack.c.l.b16 %v74
  %v214 = vunpack.c.l.b16 %v75
  %v215 = vunpack.c.l.b16 %v76
  %v216 = vunpack.c.l.b16 %v77
  %v217 = vunpack.c.l.b16 %v78
  %v218 = vunpack.c.l.b16 %v79
  %v219 = vunpack.c.l.b16 %v80
  %v220 = vunpack.c.l.b16 %v81
  %v221 = vunpack.c.l.b16 %v82
  %v222 = vunpack.c.l.b16 %v83
  %v223 = vunpack.c.l.b16 %v84
  %v224 = vunpack.c.l.b16 %v85
  %v225 = vunpack.c.l.b16 %v86
  %v226 = vunpack.c.l.b16 %v87
  %v227 = vunpack.c.l.b16 %v88
  %v228 = vunpack.c.l.b16 %v89
  %v229 = vunpack.c.l.b16 %v90
  %v230 = vunpack.c.l.b16 %v91
  %v231 = vunpack.c.l.b16 %v92
  %v232 = vunpack.c.l.b16 %v93
  %v233 = vunpack.c.l.b16 %v94
  %v234 = vunpack.c.l.b16 %v95
  %v235 = vunpack.c.l.b16 %v96
  %v236 = vpack.c.b16 %v173, %v172
  %v237 = vpack.c.b16 %v175, %v174
  %v238 = vpack.c.b16 %v177, %v176
  %v239 = vpack.c.b16 %v179, %v178
  %v240 = vpack.c.b16 %v181, %v180
  %v241 = vpack.c.b16 %v183, %v182
  %v242 = vpack.c.b16 %v185, %v184
  %v243 = vpack.c.b16 %v187, %v186
  %v244 = vpack.c.b16 %v189, %v188
  %v245 = vpack.c.b16 %v191, %v190
  %v246 = vpack.c.b16 %v193, %v192
  %v247 = vpack.c.b16 %v195, %v194
  %v248 = vpack.c.b16 %v197, %v196
  %v249 = vpack.c.b16 %v199, %v198
  %v250 = vpack.c.b16 %v201, %v200
  %v251 = vpack.c.b16 %v203, %v202
  %v252 = vpack.c.b16 %v205, %v204
  %v253 = vpack.c.b16 %v207, %v206
  %v254 = vpack.c.b16 %v209, %v208
  %v255 = vpack.c.b16 %v211, %v210
  %v256 = vpack.c.b16 %v213, %v212
  %v257 = vpack.c.b16 %v215, %v214
  %v258 = vpack.c.b16 %v217, %v216
  %v259 = vpack.c.b16 %v219, %v218
  %v260 = vpack.c.b16 %v221, %v220
  %v261 = vpack.c.b16 %v223, %v222
  %v262 = vpack.c.b16 %v225, %v224
  %v263 = vpack.c.b16 %v227, %v226
  %v264 = vpack.c.b16 %v229, %v228
  %v265 = vpack.c.b16 %v231, %v230
  %v266 = vpack.c.b16 %v233, %v232
  %v267 = vpack.c.b16 %v235, %v234
  %v272 = vunpack.c.l.b16 %v97
  %v273 = vunpack.c.l.b16 %v98
  %v274 = vunpack.c.l.b16 %v99
  %v275 = vunpack.c.l.b16 %v100
  %v276 = vpack.c.b16 %v273, %v272
  %v277 = vpack.c.b16 %v275, %v274
  %vm280 = vcmask 261120
  %v282 = vsel %vm280, %v236, 0
  %v285 = vsel %vm280, %v237, 0
  %v288 = vsel %vm280, %v238, 0
  %v291 = vsel %vm280, %v239, 0
  %v294 = vsel %vm280, %v240, 0
  %v297 = vsel %vm280, %v241, 0
  %v300 = vsel %vm280, %v242, 0
  %v303 = vsel %vm280, %v243, 0
  %v306 = vsel %vm280, %v244, 0
  %v309 = vsel %vm280, %v245, 0
  %v312 = vsel %vm280, %v246, 0
  %v315 = vsel %vm280, %v247, 0
  %v318 = vsel %vm280, %v248, 0
  %v321 = vsel %vm280, %v249, 0
  %v324 = vsel %vm280, %v250, 0
  %v327 = vsel %vm280, %v251, 0
  %v330 = vsel %vm280, %v252, 0
  %v333 = vsel %vm280, %v253, 0
  %v336 = vsel %vm280, %v254, 0
  %v339 = vsel %vm280, %v255, 0
  %v342 = vsel %vm280, %v256, 0
  %v345 = vsel %vm280, %v257, 0
  %v348 = vsel %vm280, %v258, 0
  %v351 = vsel %vm280, %v259, 0
  %v354 = vsel %vm280, %v260, 0
  %v357 = vsel %vm280, %v261, 0
  %v360 = vsel %vm280, %v262, 0
  %v363 = vsel %vm280, %v263, 0
  %v366 = vsel %vm280, %v264, 0
  %v369 = vsel %vm280, %v265, 0
  %v372 = vsel %vm280, %v266, 0
  %v375 = vsel %vm280, %v267, 0
  %377 = vmatprep.subr.bf16.mxu0 0
  %378 = vmatpush1.bf16.msra.mxu0 %v276
  %379 = vmatprep.subr.bf16.mxu0 0
  %380 = vmatpush1.bf16.msra.mxu0 %v277
  %381 = vmatprep.subr.bf16.mxu0 0
  %382 = vmatpush1.bf16.msra.mxu0 0
  %383 = vmatprep.subr.bf16.mxu0 0
  %384 = vmatpush1.bf16.msra.mxu0 0
  %385 = vmatprep.subr.bf16.mxu0 0
  %386 = vmatpush1.bf16.msra.mxu0 0
  %387 = vmatprep.subr.bf16.mxu0 0
  %388 = vmatpush1.bf16.msra.mxu0 0
  %389 = vmatprep.subr.bf16.mxu0 0
  %390 = vmatpush1.bf16.msra.mxu0 0
  %391 = vmatprep.subr.bf16.mxu0 0
  %392 = vmatpush1.bf16.msra.mxu0 0
  %393 = vmatprep.subr.bf16.mxu0 0
  %394 = vmatpush1.bf16.msra.mxu0 0
  %395 = vmatprep.subr.bf16.mxu0 0
  %396 = vmatpush1.bf16.msra.mxu0 0
  %397 = vmatprep.subr.bf16.mxu0 0
  %398 = vmatpush1.bf16.msra.mxu0 0
  %399 = vmatprep.subr.bf16.mxu0 0
  %400 = vmatpush1.bf16.msra.mxu0 0
  %401 = vmatprep.subr.bf16.mxu0 0
  %402 = vmatpush1.bf16.msra.mxu0 0
  %403 = vmatprep.subr.bf16.mxu0 0
  %404 = vmatpush1.bf16.msra.mxu0 0
  %405 = vmatprep.subr.bf16.mxu0 0
  %406 = vmatpush1.bf16.msra.mxu0 0
  %407 = vmatprep.subr.bf16.mxu0 0
  %408 = vmatpush1.bf16.msra.mxu0 0
  %409 = vmatprep.mubr.bf16.mxu0 0
  %410 = vmatmul.mubr.bf16.gmra.mrb[0].mxu0 %v282
  %v411 = vpop.f32.mrb[0].mxu0
  %v412 = vadd.f32 %v106, %v411
  %v413 = vpop.f32.mrb[0].mxu0
  %v414 = vpop.f32.mrb[0].mxu0
  %v415 = vadd.f32 %v106, %v414
  %v416 = vpop.f32.mrb[0].mxu0
  %417 = vmatprep.mubr.bf16.mxu0 0
  %418 = vmatmul.mubr.bf16.gmra.mrb[0].mxu0 %v285
  %v419 = vpop.f32.mrb[0].mxu0
  %v420 = vadd.f32 %v106, %v419
  %v421 = vpop.f32.mrb[0].mxu0
  %v422 = vpop.f32.mrb[0].mxu0
  %v423 = vadd.f32 %v106, %v422
  %v424 = vpop.f32.mrb[0].mxu0
  %425 = vmatprep.mubr.bf16.mxu0 0
  %426 = vmatmul.mubr.bf16.gmra.mrb[0].mxu0 %v288
  %v427 = vpop.f32.mrb[0].mxu0
  %v428 = vadd.f32 %v106, %v427
  %v429 = vpop.f32.mrb[0].mxu0
  %v430 = vpop.f32.mrb[0].mxu0
  %v431 = vadd.f32 %v106, %v430
  %v432 = vpop.f32.mrb[0].mxu0
  %433 = vmatprep.mubr.bf16.mxu0 0
  %434 = vmatmul.mubr.bf16.gmra.mrb[0].mxu0 %v291
  %v435 = vpop.f32.mrb[0].mxu0
  %v436 = vadd.f32 %v106, %v435
  %v437 = vpop.f32.mrb[0].mxu0
  %v438 = vpop.f32.mrb[0].mxu0
  %v439 = vadd.f32 %v106, %v438
  %v440 = vpop.f32.mrb[0].mxu0
  %441 = vmatprep.mubr.bf16.mxu0 0
  %442 = vmatmul.mubr.bf16.gmra.mrb[0].mxu0 %v294
  %v443 = vpop.f32.mrb[0].mxu0
  %v444 = vadd.f32 %v106, %v443
  %v445 = vpop.f32.mrb[0].mxu0
  %v446 = vpop.f32.mrb[0].mxu0
  %v447 = vadd.f32 %v106, %v446
  %v448 = vpop.f32.mrb[0].mxu0
  %449 = vmatprep.mubr.bf16.mxu0 0
  %450 = vmatmul.mubr.bf16.gmra.mrb[0].mxu0 %v297
  %v451 = vpop.f32.mrb[0].mxu0
  %v452 = vadd.f32 %v106, %v451
  %v453 = vpop.f32.mrb[0].mxu0
  %v454 = vpop.f32.mrb[0].mxu0
  %v455 = vadd.f32 %v106, %v454
  %v456 = vpop.f32.mrb[0].mxu0
  %457 = vmatprep.mubr.bf16.mxu0 0
  %458 = vmatmul.mubr.bf16.gmra.mrb[0].mxu0 %v300
  %v459 = vpop.f32.mrb[0].mxu0
  %v460 = vadd.f32 %v106, %v459
  %v461 = vpop.f32.mrb[0].mxu0
  %v462 = vpop.f32.mrb[0].mxu0
  %v463 = vadd.f32 %v106, %v462
  %v464 = vpop.f32.mrb[0].mxu0
  %465 = vmatprep.mubr.bf16.mxu0 0
  %466 = vmatmul.mubr.bf16.gmra.mrb[0].mxu0 %v303
  %v467 = vpop.f32.mrb[0].mxu0
  %v468 = vadd.f32 %v106, %v467
  %v469 = vpop.f32.mrb[0].mxu0
  %v470 = vpop.f32.mrb[0].mxu0
  %v471 = vadd.f32 %v106, %v470
  %v472 = vpop.f32.mrb[0].mxu0
  %473 = vmatprep.mubr.bf16.mxu0 0
  %474 = vmatmul.mubr.bf16.gmra.mrb[0].mxu0 %v306
  %v475 = vpop.f32.mrb[0].mxu0
  %v476 = vadd.f32 %v106, %v475
  %v477 = vpop.f32.mrb[0].mxu0
  %v478 = vpop.f32.mrb[0].mxu0
  %v479 = vadd.f32 %v106, %v478
  %v480 = vpop.f32.mrb[0].mxu0
  %481 = vmatprep.mubr.bf16.mxu0 0
  %482 = vmatmul.mubr.bf16.gmra.mrb[0].mxu0 %v309
  %v483 = vpop.f32.mrb[0].mxu0
  %v484 = vadd.f32 %v106, %v483
  %v485 = vpop.f32.mrb[0].mxu0
  %v486 = vpop.f32.mrb[0].mxu0
  %v487 = vadd.f32 %v106, %v486
  %v488 = vpop.f32.mrb[0].mxu0
  %489 = vmatprep.mubr.bf16.mxu0 0
  %490 = vmatmul.mubr.bf16.gmra.mrb[0].mxu0 %v312
  %v491 = vpop.f32.mrb[0].mxu0
  %v492 = vadd.f32 %v106, %v491
  %v493 = vpop.f32.mrb[0].mxu0
  %v494 = vpop.f32.mrb[0].mxu0
  %v495 = vadd.f32 %v106, %v494
  %v496 = vpop.f32.mrb[0].mxu0
  %497 = vmatprep.mubr.bf16.mxu0 0
  %498 = vmatmul.mubr.bf16.gmra.mrb[0].mxu0 %v315
  %v499 = vpop.f32.mrb[0].mxu0
  %v500 = vadd.f32 %v106, %v499
  %v501 = vpop.f32.mrb[0].mxu0
  %v502 = vpop.f32.mrb[0].mxu0
  %v503 = vadd.f32 %v106, %v502
  %v504 = vpop.f32.mrb[0].mxu0
  %505 = vmatprep.mubr.bf16.mxu0 0
  %506 = vmatmul.mubr.bf16.gmra.mrb[0].mxu0 %v318
  %v507 = vpop.f32.mrb[0].mxu0
  %v508 = vadd.f32 %v106, %v507
  %v509 = vpop.f32.mrb[0].mxu0
  %v510 = vpop.f32.mrb[0].mxu0
  %v511 = vadd.f32 %v106, %v510
  %v512 = vpop.f32.mrb[0].mxu0
  %513 = vmatprep.mubr.bf16.mxu0 0
  %514 = vmatmul.mubr.bf16.gmra.mrb[0].mxu0 %v321
  %v515 = vpop.f32.mrb[0].mxu0
  %v516 = vadd.f32 %v106, %v515
  %v517 = vpop.f32.mrb[0].mxu0
  %v518 = vpop.f32.mrb[0].mxu0
  %v519 = vadd.f32 %v106, %v518
  %v520 = vpop.f32.mrb[0].mxu0
  %521 = vmatprep.mubr.bf16.mxu0 0
  %522 = vmatmul.mubr.bf16.gmra.mrb[0].mxu0 %v324
  %v523 = vpop.f32.mrb[0].mxu0
  %v524 = vadd.f32 %v106, %v523
  %v525 = vpop.f32.mrb[0].mxu0
  %v526 = vpop.f32.mrb[0].mxu0
  %v527 = vadd.f32 %v106, %v526
  %v528 = vpop.f32.mrb[0].mxu0
  %529 = vmatprep.mubr.bf16.mxu0 0
  %530 = vmatmul.mubr.bf16.gmra.mrb[0].mxu0 %v327
  %v531 = vpop.f32.mrb[0].mxu0
  %v532 = vadd.f32 %v106, %v531
  %v533 = vpop.f32.mrb[0].mxu0
  %v534 = vpop.f32.mrb[0].mxu0
  %v535 = vadd.f32 %v106, %v534
  %v536 = vpop.f32.mrb[0].mxu0
  %537 = vmatprep.mubr.bf16.mxu0 0
  %538 = vmatmul.mubr.bf16.gmra.mrb[0].mxu0 %v330
  %v539 = vpop.f32.mrb[0].mxu0
  %v540 = vadd.f32 %v106, %v539
  %v541 = vpop.f32.mrb[0].mxu0
  %v542 = vpop.f32.mrb[0].mxu0
  %v543 = vadd.f32 %v106, %v542
  %v544 = vpop.f32.mrb[0].mxu0
  %545 = vmatprep.mubr.bf16.mxu0 0
  %546 = vmatmul.mubr.bf16.gmra.mrb[0].mxu0 %v333
  %v547 = vpop.f32.mrb[0].mxu0
  %v548 = vadd.f32 %v106, %v547
  %v549 = vpop.f32.mrb[0].mxu0
  %v550 = vpop.f32.mrb[0].mxu0
  %v551 = vadd.f32 %v106, %v550
  %v552 = vpop.f32.mrb[0].mxu0
  %553 = vmatprep.mubr.bf16.mxu0 0
  %554 = vmatmul.mubr.bf16.gmra.mrb[0].mxu0 %v336
  %v555 = vpop.f32.mrb[0].mxu0
  %v556 = vadd.f32 %v106, %v555
  %v557 = vpop.f32.mrb[0].mxu0
  %v558 = vpop.f32.mrb[0].mxu0
  %v559 = vadd.f32 %v106, %v558
  %v560 = vpop.f32.mrb[0].mxu0
  %561 = vmatprep.mubr.bf16.mxu0 0
  %562 = vmatmul.mubr.bf16.gmra.mrb[0].mxu0 %v339
  %v563 = vpop.f32.mrb[0].mxu0
  %v564 = vadd.f32 %v106, %v563
  %v565 = vpop.f32.mrb[0].mxu0
  %v566 = vpop.f32.mrb[0].mxu0
  %v567 = vadd.f32 %v106, %v566
  %v568 = vpop.f32.mrb[0].mxu0
  %569 = vmatprep.mubr.bf16.mxu0 0
  %570 = vmatmul.mubr.bf16.gmra.mrb[0].mxu0 %v342
  %v571 = vpop.f32.mrb[0].mxu0
  %v572 = vadd.f32 %v106, %v571
  %v573 = vpop.f32.mrb[0].mxu0
  %v574 = vpop.f32.mrb[0].mxu0
  %v575 = vadd.f32 %v106, %v574
  %v576 = vpop.f32.mrb[0].mxu0
  %577 = vmatprep.mubr.bf16.mxu0 0
  %578 = vmatmul.mubr.bf16.gmra.mrb[0].mxu0 %v345
  %v579 = vpop.f32.mrb[0].mxu0
  %v580 = vadd.f32 %v106, %v579
  %v581 = vpop.f32.mrb[0].mxu0
  %v582 = vpop.f32.mrb[0].mxu0
  %v583 = vadd.f32 %v106, %v582
  %v584 = vpop.f32.mrb[0].mxu0
  %585 = vmatprep.mubr.bf16.mxu0 0
  %586 = vmatmul.mubr.bf16.gmra.mrb[0].mxu0 %v348
  %v587 = vpop.f32.mrb[0].mxu0
  %v588 = vadd.f32 %v106, %v587
  %v589 = vpop.f32.mrb[0].mxu0
  %v590 = vpop.f32.mrb[0].mxu0
  %v591 = vadd.f32 %v106, %v590
  %v592 = vpop.f32.mrb[0].mxu0
  %593 = vmatprep.mubr.bf16.mxu0 0
  %594 = vmatmul.mubr.bf16.gmra.mrb[0].mxu0 %v351
  %v595 = vpop.f32.mrb[0].mxu0
  %v596 = vadd.f32 %v106, %v595
  %v597 = vpop.f32.mrb[0].mxu0
  %v598 = vpop.f32.mrb[0].mxu0
  %v599 = vadd.f32 %v106, %v598
  %v600 = vpop.f32.mrb[0].mxu0
  %601 = vmatprep.mubr.bf16.mxu0 0
  %602 = vmatmul.mubr.bf16.gmra.mrb[0].mxu0 %v354
  %v603 = vpop.f32.mrb[0].mxu0
  %v604 = vadd.f32 %v106, %v603
  %v605 = vpop.f32.mrb[0].mxu0
  %v606 = vpop.f32.mrb[0].mxu0
  %v607 = vadd.f32 %v106, %v606
  %v608 = vpop.f32.mrb[0].mxu0
  %609 = vmatprep.mubr.bf16.mxu0 0
  %610 = vmatmul.mubr.bf16.gmra.mrb[0].mxu0 %v357
  %v611 = vpop.f32.mrb[0].mxu0
  %v612 = vadd.f32 %v106, %v611
  %v613 = vpop.f32.mrb[0].mxu0
  %v614 = vpop.f32.mrb[0].mxu0
  %v615 = vadd.f32 %v106, %v614
  %v616 = vpop.f32.mrb[0].mxu0
  %617 = vmatprep.mubr.bf16.mxu0 0
  %618 = vmatmul.mubr.bf16.gmra.mrb[0].mxu0 %v360
  %v619 = vpop.f32.mrb[0].mxu0
  %v620 = vadd.f32 %v106, %v619
  %v621 = vpop.f32.mrb[0].mxu0
  %v622 = vpop.f32.mrb[0].mxu0
  %v623 = vadd.f32 %v106, %v622
  %v624 = vpop.f32.mrb[0].mxu0
  %625 = vmatprep.mubr.bf16.mxu0 0
  %626 = vmatmul.mubr.bf16.gmra.mrb[0].mxu0 %v363
  %v627 = vpop.f32.mrb[0].mxu0
  %v628 = vadd.f32 %v106, %v627
  %v629 = vpop.f32.mrb[0].mxu0
  %v630 = vpop.f32.mrb[0].mxu0
  %v631 = vadd.f32 %v106, %v630
  %v632 = vpop.f32.mrb[0].mxu0
  %633 = vmatprep.mubr.bf16.mxu0 0
  %634 = vmatmul.mubr.bf16.gmra.mrb[0].mxu0 %v366
  %v635 = vpop.f32.mrb[0].mxu0
  %v636 = vadd.f32 %v106, %v635
  %v637 = vpop.f32.mrb[0].mxu0
  %v638 = vpop.f32.mrb[0].mxu0
  %v639 = vadd.f32 %v106, %v638
  %v640 = vpop.f32.mrb[0].mxu0
  %641 = vmatprep.mubr.bf16.mxu0 0
  %642 = vmatmul.mubr.bf16.gmra.mrb[0].mxu0 %v369
  %v643 = vpop.f32.mrb[0].mxu0
  %v644 = vadd.f32 %v106, %v643
  %v645 = vpop.f32.mrb[0].mxu0
  %v646 = vpop.f32.mrb[0].mxu0
  %v647 = vadd.f32 %v106, %v646
  %v648 = vpop.f32.mrb[0].mxu0
  %649 = vmatprep.mubr.bf16.mxu0 0
  %650 = vmatmul.mubr.bf16.gmra.mrb[0].mxu0 %v372
  %v651 = vpop.f32.mrb[0].mxu0
  %v652 = vadd.f32 %v106, %v651
  %v653 = vpop.f32.mrb[0].mxu0
  %v654 = vpop.f32.mrb[0].mxu0
  %v655 = vadd.f32 %v106, %v654
  %v656 = vpop.f32.mrb[0].mxu0
  %657 = vmatprep.mubr.bf16.mxu0 0
  %658 = vmatmul.mubr.bf16.gmra.mrb[0].mxu0 %v375
  %v659 = vpop.f32.mrb[0].mxu0
  %v660 = vadd.f32 %v106, %v659
  %v661 = vpop.f32.mrb[0].mxu0
  %v662 = vpop.f32.mrb[0].mxu0
  %v663 = vadd.f32 %v106, %v662
  %v664 = vpop.f32.mrb[0].mxu0
  %665 = vdwg.mxu0
  %v666 = vmax.f32 %v412, 0.0
  %v667 = vmax.f32 %v415, 0.0
  %v668 = vmax.f32 %v420, 0.0
  %v669 = vmax.f32 %v423, 0.0
  %v670 = vmax.f32 %v428, 0.0
  %v671 = vmax.f32 %v431, 0.0
  %v672 = vmax.f32 %v436, 0.0
  %v673 = vmax.f32 %v439, 0.0
  %v674 = vmax.f32 %v444, 0.0
  %v675 = vmax.f32 %v447, 0.0
  %v676 = vmax.f32 %v452, 0.0
  %v677 = vmax.f32 %v455, 0.0
  %v678 = vmax.f32 %v460, 0.0
  %v679 = vmax.f32 %v463, 0.0
  %v680 = vmax.f32 %v468, 0.0
  %v681 = vmax.f32 %v471, 0.0
  %v682 = vmax.f32 %v476, 0.0
  %v683 = vmax.f32 %v479, 0.0
  %v684 = vmax.f32 %v484, 0.0
  %v685 = vmax.f32 %v487, 0.0
  %v686 = vmax.f32 %v492, 0.0
  %v687 = vmax.f32 %v495, 0.0
  %v688 = vmax.f32 %v500, 0.0
  %v689 = vmax.f32 %v503, 0.0
  %v690 = vmax.f32 %v508, 0.0
  %v691 = vmax.f32 %v511, 0.0
  %v692 = vmax.f32 %v516, 0.0
  %v693 = vmax.f32 %v519, 0.0
  %v694 = vmax.f32 %v524, 0.0
  %v695 = vmax.f32 %v527, 0.0
  %v696 = vmax.f32 %v532, 0.0
  %v697 = vmax.f32 %v535, 0.0
  %v698 = vmax.f32 %v540, 0.0
  %v699 = vmax.f32 %v543, 0.0
  %v700 = vmax.f32 %v548, 0.0
  %v701 = vmax.f32 %v551, 0.0
  %v702 = vmax.f32 %v556, 0.0
  %v703 = vmax.f32 %v559, 0.0
  %v704 = vmax.f32 %v564, 0.0
  %v705 = vmax.f32 %v567, 0.0
  %v706 = vmax.f32 %v572, 0.0
  %v707 = vmax.f32 %v575, 0.0
  %v708 = vmax.f32 %v580, 0.0
  %v709 = vmax.f32 %v583, 0.0
  %v710 = vmax.f32 %v588, 0.0
  %v711 = vmax.f32 %v591, 0.0
  %v712 = vmax.f32 %v596, 0.0
  %v713 = vmax.f32 %v599, 0.0
  %v714 = vmax.f32 %v604, 0.0
  %v715 = vmax.f32 %v607, 0.0
  %v716 = vmax.f32 %v612, 0.0
  %v717 = vmax.f32 %v615, 0.0
  %v718 = vmax.f32 %v620, 0.0
  %v719 = vmax.f32 %v623, 0.0
  %v720 = vmax.f32 %v628, 0.0
  %v721 = vmax.f32 %v631, 0.0
  %v722 = vmax.f32 %v636, 0.0
  %v723 = vmax.f32 %v639, 0.0
  %v724 = vmax.f32 %v644, 0.0
  %v725 = vmax.f32 %v647, 0.0
  %v726 = vmax.f32 %v652, 0.0
  %v727 = vmax.f32 %v655, 0.0
  %v728 = vmax.f32 %v660, 0.0
  %v729 = vmax.f32 %v663, 0.0
  %v730 = vpack.c.bf16 %v667, %v666
  %v731 = vpack.c.bf16 %v669, %v668
  %v732 = vpack.c.bf16 %v671, %v670
  %v733 = vpack.c.bf16 %v673, %v672
  %v734 = vpack.c.bf16 %v675, %v674
  %v735 = vpack.c.bf16 %v677, %v676
  %v736 = vpack.c.bf16 %v679, %v678
  %v737 = vpack.c.bf16 %v681, %v680
  %v738 = vpack.c.bf16 %v683, %v682
  %v739 = vpack.c.bf16 %v685, %v684
  %v740 = vpack.c.bf16 %v687, %v686
  %v741 = vpack.c.bf16 %v689, %v688
  %v742 = vpack.c.bf16 %v691, %v690
  %v743 = vpack.c.bf16 %v693, %v692
  %v744 = vpack.c.bf16 %v695, %v694
  %v745 = vpack.c.bf16 %v697, %v696
  %v746 = vpack.c.bf16 %v699, %v698
  %v747 = vpack.c.bf16 %v701, %v700
  %v748 = vpack.c.bf16 %v703, %v702
  %v749 = vpack.c.bf16 %v705, %v704
  %v750 = vpack.c.bf16 %v707, %v706
  %v751 = vpack.c.bf16 %v709, %v708
  %v752 = vpack.c.bf16 %v711, %v710
  %v753 = vpack.c.bf16 %v713, %v712
  %v754 = vpack.c.bf16 %v715, %v714
  %v755 = vpack.c.bf16 %v717, %v716
  %v756 = vpack.c.bf16 %v719, %v718
  %v757 = vpack.c.bf16 %v721, %v720
  %v758 = vpack.c.bf16 %v723, %v722
  %v759 = vpack.c.bf16 %v725, %v724
  %v760 = vpack.c.bf16 %v727, %v726
  %v761 = vpack.c.bf16 %v729, %v728
  %v762 = vld [vmem:[%s3] sm:$0xf]
  %v763 = vld [vmem:[%s3 + $0x4] sm:$0xf]
  %v764 = vld [vmem:[%s3 + $0x8] sm:$0xf]
  %v765 = vld [vmem:[%s3 + $0xc] sm:$0xf]
  %v766 = vld [vmem:[%s3 + $0x10] sm:$0xf]
  %v767 = vld [vmem:[%s3 + $0x14] sm:$0xf]
  %v768 = vld [vmem:[%s3 + $0x18] sm:$0xf]
  %v769 = vld [vmem:[%s3 + $0x1c] sm:$0xf]
  %v770 = vld [vmem:[%s3 + $0x20] sm:$0xf]
  %v771 = vld [vmem:[%s3 + $0x24] sm:$0xf]
  %v772 = vld [vmem:[%s3 + $0x28] sm:$0xf]
  %v773 = vld [vmem:[%s3 + $0x2c] sm:$0xf]
  %v774 = vld [vmem:[%s3 + $0x30] sm:$0xf]
  %v775 = vld [vmem:[%s3 + $0x34] sm:$0xf]
  %v776 = vld [vmem:[%s3 + $0x38] sm:$0xf]
  %v777 = vld [vmem:[%s3 + $0x3c] sm:$0xf]
  %v778 = vld [vmem:[%s4] sm:$0x1]
  %v780 = vlaneseq
  %v781 = vshrl.u32 %v780, 7
  %v782 = vsub.s32 0, %v781
  %v783 = vrot.slane %v778, %v782
  %v801 = vunpack.c.l.b16 %v762
  %v802 = vunpack.c.l.b16 %v763
  %v803 = vunpack.c.l.b16 %v764
  %v804 = vunpack.c.l.b16 %v765
  %v805 = vunpack.c.l.b16 %v766
  %v806 = vunpack.c.l.b16 %v767
  %v807 = vunpack.c.l.b16 %v768
  %v808 = vunpack.c.l.b16 %v769
  %v809 = vunpack.c.l.b16 %v770
  %v810 = vunpack.c.l.b16 %v771
  %v811 = vunpack.c.l.b16 %v772
  %v812 = vunpack.c.l.b16 %v773
  %v813 = vunpack.c.l.b16 %v774
  %v814 = vunpack.c.l.b16 %v775
  %v815 = vunpack.c.l.b16 %v776
  %v816 = vunpack.c.l.b16 %v777
  %v817 = vpack.c.b16 %v802, %v801
  %v818 = vpack.c.b16 %v804, %v803
  %v819 = vpack.c.b16 %v806, %v805
  %v820 = vpack.c.b16 %v808, %v807
  %v821 = vpack.c.b16 %v810, %v809
  %v822 = vpack.c.b16 %v812, %v811
  %v823 = vpack.c.b16 %v814, %v813
  %v824 = vpack.c.b16 %v816, %v815
  %833 = vmatprep.subr.bf16.mxu0 0
  %834 = vmatpush1.bf16.msra.mxu0 %v817
  %835 = vmatprep.subr.bf16.mxu0 0
  %836 = vmatpush1.bf16.msra.mxu0 %v818
  %837 = vmatprep.subr.bf16.mxu0 0
  %838 = vmatpush1.bf16.msra.mxu0 %v819
  %839 = vmatprep.subr.bf16.mxu0 0
  %840 = vmatpush1.bf16.msra.mxu0 %v820
  %841 = vmatprep.subr.bf16.mxu0 0
  %842 = vmatpush1.bf16.msra.mxu0 %v821
  %843 = vmatprep.subr.bf16.mxu0 0
  %844 = vmatpush1.bf16.msra.mxu0 %v822
  %845 = vmatprep.subr.bf16.mxu0 0
  %846 = vmatpush1.bf16.msra.mxu0 %v823
  %847 = vmatprep.subr.bf16.mxu0 0
  %848 = vmatpush1.bf16.msra.mxu0 %v824
  %849 = vmatprep.subr.bf16.mxu0 0
  %850 = vmatpush1.bf16.msra.mxu0 0
  %851 = vmatprep.subr.bf16.mxu0 0
  %852 = vmatpush1.bf16.msra.mxu0 0
  %853 = vmatprep.subr.bf16.mxu0 0
  %854 = vmatpush1.bf16.msra.mxu0 0
  %855 = vmatprep.subr.bf16.mxu0 0
  %856 = vmatpush1.bf16.msra.mxu0 0
  %857 = vmatprep.subr.bf16.mxu0 0
  %858 = vmatpush1.bf16.msra.mxu0 0
  %859 = vmatprep.subr.bf16.mxu0 0
  %860 = vmatpush1.bf16.msra.mxu0 0
  %861 = vmatprep.subr.bf16.mxu0 0
  %862 = vmatpush1.bf16.msra.mxu0 0
  %863 = vmatprep.subr.bf16.mxu0 0
  %864 = vmatpush1.bf16.msra.mxu0 0
  %865 = vmatprep.mubr.bf16.mxu0 0
  %866 = vmatmul.mubr.bf16.gmra.mrb[0].mxu0 %v730
  %v867 = vpop.f32.mrb[0].mxu0
  %v868 = vadd.f32 %v783, %v867
  %v869 = vpop.f32.mrb[0].mxu0
  %v870 = vpop.f32.mrb[0].mxu0
  %v871 = vadd.f32 %v783, %v870
  %v872 = vpop.f32.mrb[0].mxu0
  %873 = vmatprep.mubr.bf16.mxu0 0
  %874 = vmatmul.mubr.bf16.gmra.mrb[0].mxu0 %v731
  %v875 = vpop.f32.mrb[0].mxu0
  %v876 = vadd.f32 %v783, %v875
  %v877 = vpop.f32.mrb[0].mxu0
  %v878 = vpop.f32.mrb[0].mxu0
  %v879 = vadd.f32 %v783, %v878
  %v880 = vpop.f32.mrb[0].mxu0
  %881 = vmatprep.mubr.bf16.mxu0 0
  %882 = vmatmul.mubr.bf16.gmra.mrb[0].mxu0 %v732
  %v883 = vpop.f32.mrb[0].mxu0
  %v884 = vadd.f32 %v783, %v883
  %v885 = vpop.f32.mrb[0].mxu0
  %v886 = vpop.f32.mrb[0].mxu0
  %v887 = vadd.f32 %v783, %v886
  %v888 = vpop.f32.mrb[0].mxu0
  %889 = vmatprep.mubr.bf16.mxu0 0
  %890 = vmatmul.mubr.bf16.gmra.mrb[0].mxu0 %v733
  %v891 = vpop.f32.mrb[0].mxu0
  %v892 = vadd.f32 %v783, %v891
  %v893 = vpop.f32.mrb[0].mxu0
  %v894 = vpop.f32.mrb[0].mxu0
  %v895 = vadd.f32 %v783, %v894
  %v896 = vpop.f32.mrb[0].mxu0
  %897 = vmatprep.mubr.bf16.mxu0 0
  %898 = vmatmul.mubr.bf16.gmra.mrb[0].mxu0 %v734
  %v899 = vpop.f32.mrb[0].mxu0
  %v900 = vadd.f32 %v783, %v899
  %v901 = vpop.f32.mrb[0].mxu0
  %v902 = vpop.f32.mrb[0].mxu0
  %v903 = vadd.f32 %v783, %v902
  %v904 = vpop.f32.mrb[0].mxu0
  %905 = vmatprep.mubr.bf16.mxu0 0
  %906 = vmatmul.mubr.bf16.gmra.mrb[0].mxu0 %v735
  %v907 = vpop.f32.mrb[0].mxu0
  %v908 = vadd.f32 %v783, %v907
  %v909 = vpop.f32.mrb[0].mxu0
  %v910 = vpop.f32.mrb[0].mxu0
  %v911 = vadd.f32 %v783, %v910
  %v912 = vpop.f32.mrb[0].mxu0
  %913 = vmatprep.mubr.bf16.mxu0 0
  %914 = vmatmul.mubr.bf16.gmra.mrb[0].mxu0 %v736
  %v915 = vpop.f32.mrb[0].mxu0
  %v916 = vadd.f32 %v783, %v915
  %v917 = vpop.f32.mrb[0].mxu0
  %v918 = vpop.f32.mrb[0].mxu0
  %v919 = vadd.f32 %v783, %v918
  %v920 = vpop.f32.mrb[0].mxu0
  %921 = vmatprep.mubr.bf16.mxu0 0
  %922 = vmatmul.mubr.bf16.gmra.mrb[0].mxu0 %v737
  %v923 = vpop.f32.mrb[0].mxu0
  %v924 = vadd.f32 %v783, %v923
  %v925 = vpop.f32.mrb[0].mxu0
  %v926 = vpop.f32.mrb[0].mxu0
  %v927 = vadd.f32 %v783, %v926
  %v928 = vpop.f32.mrb[0].mxu0
  %929 = vmatprep.mubr.bf16.mxu0 0
  %930 = vmatmul.mubr.bf16.gmra.mrb[0].mxu0 %v738
  %v931 = vpop.f32.mrb[0].mxu0
  %v932 = vadd.f32 %v783, %v931
  %v933 = vpop.f32.mrb[0].mxu0
  %v934 = vpop.f32.mrb[0].mxu0
  %v935 = vadd.f32 %v783, %v934
  %v936 = vpop.f32.mrb[0].mxu0
  %937 = vmatprep.mubr.bf16.mxu0 0
  %938 = vmatmul.mubr.bf16.gmra.mrb[0].mxu0 %v739
  %v939 = vpop.f32.mrb[0].mxu0
  %v940 = vadd.f32 %v783, %v939
  %v941 = vpop.f32.mrb[0].mxu0
  %v942 = vpop.f32.mrb[0].mxu0
  %v943 = vadd.f32 %v783, %v942
  %v944 = vpop.f32.mrb[0].mxu0
  %945 = vmatprep.mubr.bf16.mxu0 0
  %946 = vmatmul.mubr.bf16.gmra.mrb[0].mxu0 %v740
  %v947 = vpop.f32.mrb[0].mxu0
  %v948 = vadd.f32 %v783, %v947
  %v949 = vpop.f32.mrb[0].mxu0
  %v950 = vpop.f32.mrb[0].mxu0
  %v951 = vadd.f32 %v783, %v950
  %v952 = vpop.f32.mrb[0].mxu0
  %953 = vmatprep.mubr.bf16.mxu0 0
  %954 = vmatmul.mubr.bf16.gmra.mrb[0].mxu0 %v741
  %v955 = vpop.f32.mrb[0].mxu0
  %v956 = vadd.f32 %v783, %v955
  %v957 = vpop.f32.mrb[0].mxu0
  %v958 = vpop.f32.mrb[0].mxu0
  %v959 = vadd.f32 %v783, %v958
  %v960 = vpop.f32.mrb[0].mxu0
  %961 = vmatprep.mubr.bf16.mxu0 0
  %962 = vmatmul.mubr.bf16.gmra.mrb[0].mxu0 %v742
  %v963 = vpop.f32.mrb[0].mxu0
  %v964 = vadd.f32 %v783, %v963
  %v965 = vpop.f32.mrb[0].mxu0
  %v966 = vpop.f32.mrb[0].mxu0
  %v967 = vadd.f32 %v783, %v966
  %v968 = vpop.f32.mrb[0].mxu0
  %969 = vmatprep.mubr.bf16.mxu0 0
  %970 = vmatmul.mubr.bf16.gmra.mrb[0].mxu0 %v743
  %v971 = vpop.f32.mrb[0].mxu0
  %v972 = vadd.f32 %v783, %v971
  %v973 = vpop.f32.mrb[0].mxu0
  %v974 = vpop.f32.mrb[0].mxu0
  %v975 = vadd.f32 %v783, %v974
  %v976 = vpop.f32.mrb[0].mxu0
  %977 = vmatprep.mubr.bf16.mxu0 0
  %978 = vmatmul.mubr.bf16.gmra.mrb[0].mxu0 %v744
  %v979 = vpop.f32.mrb[0].mxu0
  %v980 = vadd.f32 %v783, %v979
  %v981 = vpop.f32.mrb[0].mxu0
  %v982 = vpop.f32.mrb[0].mxu0
  %v983 = vadd.f32 %v783, %v982
  %v984 = vpop.f32.mrb[0].mxu0
  %985 = vmatprep.mubr.bf16.mxu0 0
  %986 = vmatmul.mubr.bf16.gmra.mrb[0].mxu0 %v745
  %v987 = vpop.f32.mrb[0].mxu0
  %v988 = vadd.f32 %v783, %v987
  %v989 = vpop.f32.mrb[0].mxu0
  %v990 = vpop.f32.mrb[0].mxu0
  %v991 = vadd.f32 %v783, %v990
  %v992 = vpop.f32.mrb[0].mxu0
  %993 = vmatprep.mubr.bf16.mxu0 0
  %994 = vmatmul.mubr.bf16.gmra.mrb[0].mxu0 %v746
  %v995 = vpop.f32.mrb[0].mxu0
  %v996 = vadd.f32 %v783, %v995
  %v997 = vpop.f32.mrb[0].mxu0
  %v998 = vpop.f32.mrb[0].mxu0
  %v999 = vadd.f32 %v783, %v998
  %v1000 = vpop.f32.mrb[0].mxu0
  %1001 = vmatprep.mubr.bf16.mxu0 0
  %1002 = vmatmul.mubr.bf16.gmra.mrb[0].mxu0 %v747
  %v1003 = vpop.f32.mrb[0].mxu0
  %v1004 = vadd.f32 %v783, %v1003
  %v1005 = vpop.f32.mrb[0].mxu0
  %v1006 = vpop.f32.mrb[0].mxu0
  %v1007 = vadd.f32 %v783, %v1006
  %v1008 = vpop.f32.mrb[0].mxu0
  %1009 = vmatprep.mubr.bf16.mxu0 0
  %1010 = vmatmul.mubr.bf16.gmra.mrb[0].mxu0 %v748
  %v1011 = vpop.f32.mrb[0].mxu0
  %v1012 = vadd.f32 %v783, %v1011
  %v1013 = vpop.f32.mrb[0].mxu0
  %v1014 = vpop.f32.mrb[0].mxu0
  %v1015 = vadd.f32 %v783, %v1014
  %v1016 = vpop.f32.mrb[0].mxu0
  %1017 = vmatprep.mubr.bf16.mxu0 0
  %1018 = vmatmul.mubr.bf16.gmra.mrb[0].mxu0 %v749
  %v1019 = vpop.f32.mrb[0].mxu0
  %v1020 = vadd.f32 %v783, %v1019
  %v1021 = vpop.f32.mrb[0].mxu0
  %v1022 = vpop.f32.mrb[0].mxu0
  %v1023 = vadd.f32 %v783, %v1022
  %v1024 = vpop.f32.mrb[0].mxu0
  %1025 = vmatprep.mubr.bf16.mxu0 0
  %1026 = vmatmul.mubr.bf16.gmra.mrb[0].mxu0 %v750
  %v1027 = vpop.f32.mrb[0].mxu0
  %v1028 = vadd.f32 %v783, %v1027
  %v1029 = vpop.f32.mrb[0].mxu0
  %v1030 = vpop.f32.mrb[0].mxu0
  %v1031 = vadd.f32 %v783, %v1030
  %v1032 = vpop.f32.mrb[0].mxu0
  %1033 = vmatprep.mubr.bf16.mxu0 0
  %1034 = vmatmul.mubr.bf16.gmra.mrb[0].mxu0 %v751
  %v1035 = vpop.f32.mrb[0].mxu0
  %v1036 = vadd.f32 %v783, %v1035
  %v1037 = vpop.f32.mrb[0].mxu0
  %v1038 = vpop.f32.mrb[0].mxu0
  %v1039 = vadd.f32 %v783, %v1038
  %v1040 = vpop.f32.mrb[0].mxu0
  %1041 = vmatprep.mubr.bf16.mxu0 0
  %1042 = vmatmul.mubr.bf16.gmra.mrb[0].mxu0 %v752
  %v1043 = vpop.f32.mrb[0].mxu0
  %v1044 = vadd.f32 %v783, %v1043
  %v1045 = vpop.f32.mrb[0].mxu0
  %v1046 = vpop.f32.mrb[0].mxu0
  %v1047 = vadd.f32 %v783, %v1046
  %v1048 = vpop.f32.mrb[0].mxu0
  %1049 = vmatprep.mubr.bf16.mxu0 0
  %1050 = vmatmul.mubr.bf16.gmra.mrb[0].mxu0 %v753
  %v1051 = vpop.f32.mrb[0].mxu0
  %v1052 = vadd.f32 %v783, %v1051
  %v1053 = vpop.f32.mrb[0].mxu0
  %v1054 = vpop.f32.mrb[0].mxu0
  %v1055 = vadd.f32 %v783, %v1054
  %v1056 = vpop.f32.mrb[0].mxu0
  %1057 = vmatprep.mubr.bf16.mxu0 0
  %1058 = vmatmul.mubr.bf16.gmra.mrb[0].mxu0 %v754
  %v1059 = vpop.f32.mrb[0].mxu0
  %v1060 = vadd.f32 %v783, %v1059
  %v1061 = vpop.f32.mrb[0].mxu0
  %v1062 = vpop.f32.mrb[0].mxu0
  %v1063 = vadd.f32 %v783, %v1062
  %v1064 = vpop.f32.mrb[0].mxu0
  %1065 = vmatprep.mubr.bf16.mxu0 0
  %1066 = vmatmul.mubr.bf16.gmra.mrb[0].mxu0 %v755
  %v1067 = vpop.f32.mrb[0].mxu0
  %v1068 = vadd.f32 %v783, %v1067
  %v1069 = vpop.f32.mrb[0].mxu0
  %v1070 = vpop.f32.mrb[0].mxu0
  %v1071 = vadd.f32 %v783, %v1070
  %v1072 = vpop.f32.mrb[0].mxu0
  %1073 = vmatprep.mubr.bf16.mxu0 0
  %1074 = vmatmul.mubr.bf16.gmra.mrb[0].mxu0 %v756
  %v1075 = vpop.f32.mrb[0].mxu0
  %v1076 = vadd.f32 %v783, %v1075
  %v1077 = vpop.f32.mrb[0].mxu0
  %v1078 = vpop.f32.mrb[0].mxu0
  %v1079 = vadd.f32 %v783, %v1078
  %v1080 = vpop.f32.mrb[0].mxu0
  %1081 = vmatprep.mubr.bf16.mxu0 0
  %1082 = vmatmul.mubr.bf16.gmra.mrb[0].mxu0 %v757
  %v1083 = vpop.f32.mrb[0].mxu0
  %v1084 = vadd.f32 %v783, %v1083
  %v1085 = vpop.f32.mrb[0].mxu0
  %v1086 = vpop.f32.mrb[0].mxu0
  %v1087 = vadd.f32 %v783, %v1086
  %v1088 = vpop.f32.mrb[0].mxu0
  %1089 = vmatprep.mubr.bf16.mxu0 0
  %1090 = vmatmul.mubr.bf16.gmra.mrb[0].mxu0 %v758
  %v1091 = vpop.f32.mrb[0].mxu0
  %v1092 = vadd.f32 %v783, %v1091
  %v1093 = vpop.f32.mrb[0].mxu0
  %v1094 = vpop.f32.mrb[0].mxu0
  %v1095 = vadd.f32 %v783, %v1094
  %v1096 = vpop.f32.mrb[0].mxu0
  %1097 = vmatprep.mubr.bf16.mxu0 0
  %1098 = vmatmul.mubr.bf16.gmra.mrb[0].mxu0 %v759
  %v1099 = vpop.f32.mrb[0].mxu0
  %v1100 = vadd.f32 %v783, %v1099
  %v1101 = vpop.f32.mrb[0].mxu0
  %v1102 = vpop.f32.mrb[0].mxu0
  %v1103 = vadd.f32 %v783, %v1102
  %v1104 = vpop.f32.mrb[0].mxu0
  %1105 = vmatprep.mubr.bf16.mxu0 0
  %1106 = vmatmul.mubr.bf16.gmra.mrb[0].mxu0 %v760
  %v1107 = vpop.f32.mrb[0].mxu0
  %v1108 = vadd.f32 %v783, %v1107
  %v1109 = vpop.f32.mrb[0].mxu0
  %v1110 = vpop.f32.mrb[0].mxu0
  %v1111 = vadd.f32 %v783, %v1110
  %v1112 = vpop.f32.mrb[0].mxu0
  %1113 = vmatprep.mubr.bf16.mxu0 0
  %1114 = vmatmul.mubr.bf16.gmra.mrb[0].mxu0 %v761
  %v1115 = vpop.f32.mrb[0].mxu0
  %v1116 = vadd.f32 %v783, %v1115
  %v1117 = vpop.f32.mrb[0].mxu0
  %v1118 = vpop.f32.mrb[0].mxu0
  %v1119 = vadd.f32 %v783, %v1118
  %v1120 = vpop.f32.mrb[0].mxu0
  %1121 = vdwg.mxu0
  %v1122 = vmax.f32 %v868, 0.0
  %v1123 = vmax.f32 %v871, 0.0
  %v1124 = vmax.f32 %v876, 0.0
  %v1125 = vmax.f32 %v879, 0.0
  %v1126 = vmax.f32 %v884, 0.0
  %v1127 = vmax.f32 %v887, 0.0
  %v1128 = vmax.f32 %v892, 0.0
  %v1129 = vmax.f32 %v895, 0.0
  %v1130 = vmax.f32 %v900, 0.0
  %v1131 = vmax.f32 %v903, 0.0
  %v1132 = vmax.f32 %v908, 0.0
  %v1133 = vmax.f32 %v911, 0.0
  %v1134 = vmax.f32 %v916, 0.0
  %v1135 = vmax.f32 %v919, 0.0
  %v1136 = vmax.f32 %v924, 0.0
  %v1137 = vmax.f32 %v927, 0.0
  %v1138 = vmax.f32 %v932, 0.0
  %v1139 = vmax.f32 %v935, 0.0
  %v1140 = vmax.f32 %v940, 0.0
  %v1141 = vmax.f32 %v943, 0.0
  %v1142 = vmax.f32 %v948, 0.0
  %v1143 = vmax.f32 %v951, 0.0
  %v1144 = vmax.f32 %v956, 0.0
  %v1145 = vmax.f32 %v959, 0.0
  %v1146 = vmax.f32 %v964, 0.0
  %v1147 = vmax.f32 %v967, 0.0
  %v1148 = vmax.f32 %v972, 0.0
  %v1149 = vmax.f32 %v975, 0.0
  %v1150 = vmax.f32 %v980, 0.0
  %v1151 = vmax.f32 %v983, 0.0
  %v1152 = vmax.f32 %v988, 0.0
  %v1153 = vmax.f32 %v991, 0.0
  %v1154 = vmax.f32 %v996, 0.0
  %v1155 = vmax.f32 %v999, 0.0
  %v1156 = vmax.f32 %v1004, 0.0
  %v1157 = vmax.f32 %v1007, 0.0
  %v1158 = vmax.f32 %v1012, 0.0
  %v1159 = vmax.f32 %v1015, 0.0
  %v1160 = vmax.f32 %v1020, 0.0
  %v1161 = vmax.f32 %v1023, 0.0
  %v1162 = vmax.f32 %v1028, 0.0
  %v1163 = vmax.f32 %v1031, 0.0
  %v1164 = vmax.f32 %v1036, 0.0
  %v1165 = vmax.f32 %v1039, 0.0
  %v1166 = vmax.f32 %v1044, 0.0
  %v1167 = vmax.f32 %v1047, 0.0
  %v1168 = vmax.f32 %v1052, 0.0
  %v1169 = vmax.f32 %v1055, 0.0
  %v1170 = vmax.f32 %v1060, 0.0
  %v1171 = vmax.f32 %v1063, 0.0
  %v1172 = vmax.f32 %v1068, 0.0
  %v1173 = vmax.f32 %v1071, 0.0
  %v1174 = vmax.f32 %v1076, 0.0
  %v1175 = vmax.f32 %v1079, 0.0
  %v1176 = vmax.f32 %v1084, 0.0
  %v1177 = vmax.f32 %v1087, 0.0
  %v1178 = vmax.f32 %v1092, 0.0
  %v1179 = vmax.f32 %v1095, 0.0
  %v1180 = vmax.f32 %v1100, 0.0
  %v1181 = vmax.f32 %v1103, 0.0
  %v1182 = vmax.f32 %v1108, 0.0
  %v1183 = vmax.f32 %v1111, 0.0
  %v1184 = vmax.f32 %v1116, 0.0
  %v1185 = vmax.f32 %v1119, 0.0
  %v1186 = vpack.c.bf16 %v1123, %v1122
  %v1187 = vpack.c.bf16 %v1125, %v1124
  %v1188 = vpack.c.bf16 %v1127, %v1126
  %v1189 = vpack.c.bf16 %v1129, %v1128
  %v1190 = vpack.c.bf16 %v1131, %v1130
  %v1191 = vpack.c.bf16 %v1133, %v1132
  %v1192 = vpack.c.bf16 %v1135, %v1134
  %v1193 = vpack.c.bf16 %v1137, %v1136
  %v1194 = vpack.c.bf16 %v1139, %v1138
  %v1195 = vpack.c.bf16 %v1141, %v1140
  %v1196 = vpack.c.bf16 %v1143, %v1142
  %v1197 = vpack.c.bf16 %v1145, %v1144
  %v1198 = vpack.c.bf16 %v1147, %v1146
  %v1199 = vpack.c.bf16 %v1149, %v1148
  %v1200 = vpack.c.bf16 %v1151, %v1150
  %v1201 = vpack.c.bf16 %v1153, %v1152
  %v1202 = vpack.c.bf16 %v1155, %v1154
  %v1203 = vpack.c.bf16 %v1157, %v1156
  %v1204 = vpack.c.bf16 %v1159, %v1158
  %v1205 = vpack.c.bf16 %v1161, %v1160
  %v1206 = vpack.c.bf16 %v1163, %v1162
  %v1207 = vpack.c.bf16 %v1165, %v1164
  %v1208 = vpack.c.bf16 %v1167, %v1166
  %v1209 = vpack.c.bf16 %v1169, %v1168
  %v1210 = vpack.c.bf16 %v1171, %v1170
  %v1211 = vpack.c.bf16 %v1173, %v1172
  %v1212 = vpack.c.bf16 %v1175, %v1174
  %v1213 = vpack.c.bf16 %v1177, %v1176
  %v1214 = vpack.c.bf16 %v1179, %v1178
  %v1215 = vpack.c.bf16 %v1181, %v1180
  %v1216 = vpack.c.bf16 %v1183, %v1182
  %v1217 = vpack.c.bf16 %v1185, %v1184
  %v1218 = vld [vmem:[%s5] sm:$0xf]
  %v1219 = vld [vmem:[%s5 + $0x4] sm:$0xf]
  %v1220 = vld [vmem:[%s5 + $0x8] sm:$0xf]
  %v1221 = vld [vmem:[%s5 + $0xc] sm:$0xf]
  %v1222 = vld [vmem:[%s5 + $0x10] sm:$0xf]
  %v1223 = vld [vmem:[%s5 + $0x14] sm:$0xf]
  %v1224 = vld [vmem:[%s5 + $0x18] sm:$0xf]
  %v1225 = vld [vmem:[%s5 + $0x1c] sm:$0xf]
  %v1226 = vld [vmem:[%s5 + $0x20] sm:$0xf]
  %v1227 = vld [vmem:[%s5 + $0x24] sm:$0xf]
  %v1228 = vld [vmem:[%s5 + $0x28] sm:$0xf]
  %v1229 = vld [vmem:[%s5 + $0x2c] sm:$0xf]
  %v1230 = vld [vmem:[%s5 + $0x30] sm:$0xf]
  %v1231 = vld [vmem:[%s5 + $0x34] sm:$0xf]
  %v1232 = vld [vmem:[%s5 + $0x38] sm:$0xf]
  %v1233 = vld [vmem:[%s5 + $0x3c] sm:$0xf]
  %v1234 = vld [vmem:[%s6] sm:$0x1]
  %v1236 = vlaneseq
  %v1237 = vshrl.u32 %v1236, 7
  %v1238 = vsub.s32 0, %v1237
  %v1239 = vrot.slane %v1234, %v1238
  %v1257 = vunpack.c.l.b16 %v1218
  %v1258 = vunpack.c.l.b16 %v1219
  %v1259 = vunpack.c.l.b16 %v1220
  %v1260 = vunpack.c.l.b16 %v1221
  %v1261 = vunpack.c.l.b16 %v1222
  %v1262 = vunpack.c.l.b16 %v1223
  %v1263 = vunpack.c.l.b16 %v1224
  %v1264 = vunpack.c.l.b16 %v1225
  %v1265 = vunpack.c.l.b16 %v1226
  %v1266 = vunpack.c.l.b16 %v1227
  %v1267 = vunpack.c.l.b16 %v1228
  %v1268 = vunpack.c.l.b16 %v1229
  %v1269 = vunpack.c.l.b16 %v1230
  %v1270 = vunpack.c.l.b16 %v1231
  %v1271 = vunpack.c.l.b16 %v1232
  %v1272 = vunpack.c.l.b16 %v1233
  %v1273 = vpack.c.b16 %v1258, %v1257
  %v1274 = vpack.c.b16 %v1260, %v1259
  %v1275 = vpack.c.b16 %v1262, %v1261
  %v1276 = vpack.c.b16 %v1264, %v1263
  %v1277 = vpack.c.b16 %v1266, %v1265
  %v1278 = vpack.c.b16 %v1268, %v1267
  %v1279 = vpack.c.b16 %v1270, %v1269
  %v1280 = vpack.c.b16 %v1272, %v1271
  %1289 = vmatprep.subr.bf16.mxu0 0
  %1290 = vmatpush1.bf16.msra.mxu0 %v1273
  %1291 = vmatprep.subr.bf16.mxu0 0
  %1292 = vmatpush1.bf16.msra.mxu0 %v1274
  %1293 = vmatprep.subr.bf16.mxu0 0
  %1294 = vmatpush1.bf16.msra.mxu0 %v1275
  %1295 = vmatprep.subr.bf16.mxu0 0
  %1296 = vmatpush1.bf16.msra.mxu0 %v1276
  %1297 = vmatprep.subr.bf16.mxu0 0
  %1298 = vmatpush1.bf16.msra.mxu0 %v1277
  %1299 = vmatprep.subr.bf16.mxu0 0
  %1300 = vmatpush1.bf16.msra.mxu0 %v1278
  %1301 = vmatprep.subr.bf16.mxu0 0
  %1302 = vmatpush1.bf16.msra.mxu0 %v1279
  %1303 = vmatprep.subr.bf16.mxu0 0
  %1304 = vmatpush1.bf16.msra.mxu0 %v1280
  %1305 = vmatprep.subr.bf16.mxu0 0
  %1306 = vmatpush1.bf16.msra.mxu0 0
  %1307 = vmatprep.subr.bf16.mxu0 0
  %1308 = vmatpush1.bf16.msra.mxu0 0
  %1309 = vmatprep.subr.bf16.mxu0 0
  %1310 = vmatpush1.bf16.msra.mxu0 0
  %1311 = vmatprep.subr.bf16.mxu0 0
  %1312 = vmatpush1.bf16.msra.mxu0 0
  %1313 = vmatprep.subr.bf16.mxu0 0
  %1314 = vmatpush1.bf16.msra.mxu0 0
  %1315 = vmatprep.subr.bf16.mxu0 0
  %1316 = vmatpush1.bf16.msra.mxu0 0
  %1317 = vmatprep.subr.bf16.mxu0 0
  %1318 = vmatpush1.bf16.msra.mxu0 0
  %1319 = vmatprep.subr.bf16.mxu0 0
  %1320 = vmatpush1.bf16.msra.mxu0 0
  %1321 = vmatprep.mubr.bf16.mxu0 0
  %1322 = vmatmul.mubr.bf16.gmra.mrb[0].mxu0 %v1186
  %v1323 = vpop.f32.mrb[0].mxu0
  %v1324 = vadd.f32 %v1239, %v1323
  %v1325 = vpop.f32.mrb[0].mxu0
  %v1326 = vpop.f32.mrb[0].mxu0
  %v1327 = vadd.f32 %v1239, %v1326
  %v1328 = vpop.f32.mrb[0].mxu0
  %1329 = vmatprep.mubr.bf16.mxu0 0
  %1330 = vmatmul.mubr.bf16.gmra.mrb[0].mxu0 %v1187
  %v1331 = vpop.f32.mrb[0].mxu0
  %v1332 = vadd.f32 %v1239, %v1331
  %v1333 = vpop.f32.mrb[0].mxu0
  %v1334 = vpop.f32.mrb[0].mxu0
  %v1335 = vadd.f32 %v1239, %v1334
  %v1336 = vpop.f32.mrb[0].mxu0
  %1337 = vmatprep.mubr.bf16.mxu0 0
  %1338 = vmatmul.mubr.bf16.gmra.mrb[0].mxu0 %v1188
  %v1339 = vpop.f32.mrb[0].mxu0
  %v1340 = vadd.f32 %v1239, %v1339
  %v1341 = vpop.f32.mrb[0].mxu0
  %v1342 = vpop.f32.mrb[0].mxu0
  %v1343 = vadd.f32 %v1239, %v1342
  %v1344 = vpop.f32.mrb[0].mxu0
  %1345 = vmatprep.mubr.bf16.mxu0 0
  %1346 = vmatmul.mubr.bf16.gmra.mrb[0].mxu0 %v1189
  %v1347 = vpop.f32.mrb[0].mxu0
  %v1348 = vadd.f32 %v1239, %v1347
  %v1349 = vpop.f32.mrb[0].mxu0
  %v1350 = vpop.f32.mrb[0].mxu0
  %v1351 = vadd.f32 %v1239, %v1350
  %v1352 = vpop.f32.mrb[0].mxu0
  %1353 = vmatprep.mubr.bf16.mxu0 0
  %1354 = vmatmul.mubr.bf16.gmra.mrb[0].mxu0 %v1190
  %v1355 = vpop.f32.mrb[0].mxu0
  %v1356 = vadd.f32 %v1239, %v1355
  %v1357 = vpop.f32.mrb[0].mxu0
  %v1358 = vpop.f32.mrb[0].mxu0
  %v1359 = vadd.f32 %v1239, %v1358
  %v1360 = vpop.f32.mrb[0].mxu0
  %1361 = vmatprep.mubr.bf16.mxu0 0
  %1362 = vmatmul.mubr.bf16.gmra.mrb[0].mxu0 %v1191
  %v1363 = vpop.f32.mrb[0].mxu0
  %v1364 = vadd.f32 %v1239, %v1363
  %v1365 = vpop.f32.mrb[0].mxu0
  %v1366 = vpop.f32.mrb[0].mxu0
  %v1367 = vadd.f32 %v1239, %v1366
  %v1368 = vpop.f32.mrb[0].mxu0
  %1369 = vmatprep.mubr.bf16.mxu0 0
  %1370 = vmatmul.mubr.bf16.gmra.mrb[0].mxu0 %v1192
  %v1371 = vpop.f32.mrb[0].mxu0
  %v1372 = vadd.f32 %v1239, %v1371
  %v1373 = vpop.f32.mrb[0].mxu0
  %v1374 = vpop.f32.mrb[0].mxu0
  %v1375 = vadd.f32 %v1239, %v1374
  %v1376 = vpop.f32.mrb[0].mxu0
  %1377 = vmatprep.mubr.bf16.mxu0 0
  %1378 = vmatmul.mubr.bf16.gmra.mrb[0].mxu0 %v1193
  %v1379 = vpop.f32.mrb[0].mxu0
  %v1380 = vadd.f32 %v1239, %v1379
  %v1381 = vpop.f32.mrb[0].mxu0
  %v1382 = vpop.f32.mrb[0].mxu0
  %v1383 = vadd.f32 %v1239, %v1382
  %v1384 = vpop.f32.mrb[0].mxu0
  %1385 = vmatprep.mubr.bf16.mxu0 0
  %1386 = vmatmul.mubr.bf16.gmra.mrb[0].mxu0 %v1194
  %v1387 = vpop.f32.mrb[0].mxu0
  %v1388 = vadd.f32 %v1239, %v1387
  %v1389 = vpop.f32.mrb[0].mxu0
  %v1390 = vpop.f32.mrb[0].mxu0
  %v1391 = vadd.f32 %v1239, %v1390
  %v1392 = vpop.f32.mrb[0].mxu0
  %1393 = vmatprep.mubr.bf16.mxu0 0
  %1394 = vmatmul.mubr.bf16.gmra.mrb[0].mxu0 %v1195
  %v1395 = vpop.f32.mrb[0].mxu0
  %v1396 = vadd.f32 %v1239, %v1395
  %v1397 = vpop.f32.mrb[0].mxu0
  %v1398 = vpop.f32.mrb[0].mxu0
  %v1399 = vadd.f32 %v1239, %v1398
  %v1400 = vpop.f32.mrb[0].mxu0
  %1401 = vmatprep.mubr.bf16.mxu0 0
  %1402 = vmatmul.mubr.bf16.gmra.mrb[0].mxu0 %v1196
  %v1403 = vpop.f32.mrb[0].mxu0
  %v1404 = vadd.f32 %v1239, %v1403
  %v1405 = vpop.f32.mrb[0].mxu0
  %v1406 = vpop.f32.mrb[0].mxu0
  %v1407 = vadd.f32 %v1239, %v1406
  %v1408 = vpop.f32.mrb[0].mxu0
  %1409 = vmatprep.mubr.bf16.mxu0 0
  %1410 = vmatmul.mubr.bf16.gmra.mrb[0].mxu0 %v1197
  %v1411 = vpop.f32.mrb[0].mxu0
  %v1412 = vadd.f32 %v1239, %v1411
  %v1413 = vpop.f32.mrb[0].mxu0
  %v1414 = vpop.f32.mrb[0].mxu0
  %v1415 = vadd.f32 %v1239, %v1414
  %v1416 = vpop.f32.mrb[0].mxu0
  %1417 = vmatprep.mubr.bf16.mxu0 0
  %1418 = vmatmul.mubr.bf16.gmra.mrb[0].mxu0 %v1198
  %v1419 = vpop.f32.mrb[0].mxu0
  %v1420 = vadd.f32 %v1239, %v1419
  %v1421 = vpop.f32.mrb[0].mxu0
  %v1422 = vpop.f32.mrb[0].mxu0
  %v1423 = vadd.f32 %v1239, %v1422
  %v1424 = vpop.f32.mrb[0].mxu0
  %1425 = vmatprep.mubr.bf16.mxu0 0
  %1426 = vmatmul.mubr.bf16.gmra.mrb[0].mxu0 %v1199
  %v1427 = vpop.f32.mrb[0].mxu0
  %v1428 = vadd.f32 %v1239, %v1427
  %v1429 = vpop.f32.mrb[0].mxu0
  %v1430 = vpop.f32.mrb[0].mxu0
  %v1431 = vadd.f32 %v1239, %v1430
  %v1432 = vpop.f32.mrb[0].mxu0
  %1433 = vmatprep.mubr.bf16.mxu0 0
  %1434 = vmatmul.mubr.bf16.gmra.mrb[0].mxu0 %v1200
  %v1435 = vpop.f32.mrb[0].mxu0
  %v1436 = vadd.f32 %v1239, %v1435
  %v1437 = vpop.f32.mrb[0].mxu0
  %v1438 = vpop.f32.mrb[0].mxu0
  %v1439 = vadd.f32 %v1239, %v1438
  %v1440 = vpop.f32.mrb[0].mxu0
  %1441 = vmatprep.mubr.bf16.mxu0 0
  %1442 = vmatmul.mubr.bf16.gmra.mrb[0].mxu0 %v1201
  %v1443 = vpop.f32.mrb[0].mxu0
  %v1444 = vadd.f32 %v1239, %v1443
  %v1445 = vpop.f32.mrb[0].mxu0
  %v1446 = vpop.f32.mrb[0].mxu0
  %v1447 = vadd.f32 %v1239, %v1446
  %v1448 = vpop.f32.mrb[0].mxu0
  %1449 = vmatprep.mubr.bf16.mxu0 0
  %1450 = vmatmul.mubr.bf16.gmra.mrb[0].mxu0 %v1202
  %v1451 = vpop.f32.mrb[0].mxu0
  %v1452 = vadd.f32 %v1239, %v1451
  %v1453 = vpop.f32.mrb[0].mxu0
  %v1454 = vpop.f32.mrb[0].mxu0
  %v1455 = vadd.f32 %v1239, %v1454
  %v1456 = vpop.f32.mrb[0].mxu0
  %1457 = vmatprep.mubr.bf16.mxu0 0
  %1458 = vmatmul.mubr.bf16.gmra.mrb[0].mxu0 %v1203
  %v1459 = vpop.f32.mrb[0].mxu0
  %v1460 = vadd.f32 %v1239, %v1459
  %v1461 = vpop.f32.mrb[0].mxu0
  %v1462 = vpop.f32.mrb[0].mxu0
  %v1463 = vadd.f32 %v1239, %v1462
  %v1464 = vpop.f32.mrb[0].mxu0
  %1465 = vmatprep.mubr.bf16.mxu0 0
  %1466 = vmatmul.mubr.bf16.gmra.mrb[0].mxu0 %v1204
  %v1467 = vpop.f32.mrb[0].mxu0
  %v1468 = vadd.f32 %v1239, %v1467
  %v1469 = vpop.f32.mrb[0].mxu0
  %v1470 = vpop.f32.mrb[0].mxu0
  %v1471 = vadd.f32 %v1239, %v1470
  %v1472 = vpop.f32.mrb[0].mxu0
  %1473 = vmatprep.mubr.bf16.mxu0 0
  %1474 = vmatmul.mubr.bf16.gmra.mrb[0].mxu0 %v1205
  %v1475 = vpop.f32.mrb[0].mxu0
  %v1476 = vadd.f32 %v1239, %v1475
  %v1477 = vpop.f32.mrb[0].mxu0
  %v1478 = vpop.f32.mrb[0].mxu0
  %v1479 = vadd.f32 %v1239, %v1478
  %v1480 = vpop.f32.mrb[0].mxu0
  %1481 = vmatprep.mubr.bf16.mxu0 0
  %1482 = vmatmul.mubr.bf16.gmra.mrb[0].mxu0 %v1206
  %v1483 = vpop.f32.mrb[0].mxu0
  %v1484 = vadd.f32 %v1239, %v1483
  %v1485 = vpop.f32.mrb[0].mxu0
  %v1486 = vpop.f32.mrb[0].mxu0
  %v1487 = vadd.f32 %v1239, %v1486
  %v1488 = vpop.f32.mrb[0].mxu0
  %1489 = vmatprep.mubr.bf16.mxu0 0
  %1490 = vmatmul.mubr.bf16.gmra.mrb[0].mxu0 %v1207
  %v1491 = vpop.f32.mrb[0].mxu0
  %v1492 = vadd.f32 %v1239, %v1491
  %v1493 = vpop.f32.mrb[0].mxu0
  %v1494 = vpop.f32.mrb[0].mxu0
  %v1495 = vadd.f32 %v1239, %v1494
  %v1496 = vpop.f32.mrb[0].mxu0
  %1497 = vmatprep.mubr.bf16.mxu0 0
  %1498 = vmatmul.mubr.bf16.gmra.mrb[0].mxu0 %v1208
  %v1499 = vpop.f32.mrb[0].mxu0
  %v1500 = vadd.f32 %v1239, %v1499
  %v1501 = vpop.f32.mrb[0].mxu0
  %v1502 = vpop.f32.mrb[0].mxu0
  %v1503 = vadd.f32 %v1239, %v1502
  %v1504 = vpop.f32.mrb[0].mxu0
  %1505 = vmatprep.mubr.bf16.mxu0 0
  %1506 = vmatmul.mubr.bf16.gmra.mrb[0].mxu0 %v1209
  %v1507 = vpop.f32.mrb[0].mxu0
  %v1508 = vadd.f32 %v1239, %v1507
  %v1509 = vpop.f32.mrb[0].mxu0
  %v1510 = vpop.f32.mrb[0].mxu0
  %v1511 = vadd.f32 %v1239, %v1510
  %v1512 = vpop.f32.mrb[0].mxu0
  %1513 = vmatprep.mubr.bf16.mxu0 0
  %1514 = vmatmul.mubr.bf16.gmra.mrb[0].mxu0 %v1210
  %v1515 = vpop.f32.mrb[0].mxu0
  %v1516 = vadd.f32 %v1239, %v1515
  %v1517 = vpop.f32.mrb[0].mxu0
  %v1518 = vpop.f32.mrb[0].mxu0
  %v1519 = vadd.f32 %v1239, %v1518
  %v1520 = vpop.f32.mrb[0].mxu0
  %1521 = vmatprep.mubr.bf16.mxu0 0
  %1522 = vmatmul.mubr.bf16.gmra.mrb[0].mxu0 %v1211
  %v1523 = vpop.f32.mrb[0].mxu0
  %v1524 = vadd.f32 %v1239, %v1523
  %v1525 = vpop.f32.mrb[0].mxu0
  %v1526 = vpop.f32.mrb[0].mxu0
  %v1527 = vadd.f32 %v1239, %v1526
  %v1528 = vpop.f32.mrb[0].mxu0
  %1529 = vmatprep.mubr.bf16.mxu0 0
  %1530 = vmatmul.mubr.bf16.gmra.mrb[0].mxu0 %v1212
  %v1531 = vpop.f32.mrb[0].mxu0
  %v1532 = vadd.f32 %v1239, %v1531
  %v1533 = vpop.f32.mrb[0].mxu0
  %v1534 = vpop.f32.mrb[0].mxu0
  %v1535 = vadd.f32 %v1239, %v1534
  %v1536 = vpop.f32.mrb[0].mxu0
  %1537 = vmatprep.mubr.bf16.mxu0 0
  %1538 = vmatmul.mubr.bf16.gmra.mrb[0].mxu0 %v1213
  %v1539 = vpop.f32.mrb[0].mxu0
  %v1540 = vadd.f32 %v1239, %v1539
  %v1541 = vpop.f32.mrb[0].mxu0
  %v1542 = vpop.f32.mrb[0].mxu0
  %v1543 = vadd.f32 %v1239, %v1542
  %v1544 = vpop.f32.mrb[0].mxu0
  %1545 = vmatprep.mubr.bf16.mxu0 0
  %1546 = vmatmul.mubr.bf16.gmra.mrb[0].mxu0 %v1214
  %v1547 = vpop.f32.mrb[0].mxu0
  %v1548 = vadd.f32 %v1239, %v1547
  %v1549 = vpop.f32.mrb[0].mxu0
  %v1550 = vpop.f32.mrb[0].mxu0
  %v1551 = vadd.f32 %v1239, %v1550
  %v1552 = vpop.f32.mrb[0].mxu0
  %1553 = vmatprep.mubr.bf16.mxu0 0
  %1554 = vmatmul.mubr.bf16.gmra.mrb[0].mxu0 %v1215
  %v1555 = vpop.f32.mrb[0].mxu0
  %v1556 = vadd.f32 %v1239, %v1555
  %v1557 = vpop.f32.mrb[0].mxu0
  %v1558 = vpop.f32.mrb[0].mxu0
  %v1559 = vadd.f32 %v1239, %v1558
  %v1560 = vpop.f32.mrb[0].mxu0
  %1561 = vmatprep.mubr.bf16.mxu0 0
  %1562 = vmatmul.mubr.bf16.gmra.mrb[0].mxu0 %v1216
  %v1563 = vpop.f32.mrb[0].mxu0
  %v1564 = vadd.f32 %v1239, %v1563
  %v1565 = vpop.f32.mrb[0].mxu0
  %v1566 = vpop.f32.mrb[0].mxu0
  %v1567 = vadd.f32 %v1239, %v1566
  %v1568 = vpop.f32.mrb[0].mxu0
  %1569 = vmatprep.mubr.bf16.mxu0 0
  %1570 = vmatmul.mubr.bf16.gmra.mrb[0].mxu0 %v1217
  %v1571 = vpop.f32.mrb[0].mxu0
  %v1572 = vadd.f32 %v1239, %v1571
  %v1573 = vpop.f32.mrb[0].mxu0
  %v1574 = vpop.f32.mrb[0].mxu0
  %v1575 = vadd.f32 %v1239, %v1574
  %v1576 = vpop.f32.mrb[0].mxu0
  %1577 = vdwg.mxu0
  %v1578 = vmax.f32 %v1324, 0.0
  %v1579 = vmax.f32 %v1327, 0.0
  %v1580 = vmax.f32 %v1332, 0.0
  %v1581 = vmax.f32 %v1335, 0.0
  %v1582 = vmax.f32 %v1340, 0.0
  %v1583 = vmax.f32 %v1343, 0.0
  %v1584 = vmax.f32 %v1348, 0.0
  %v1585 = vmax.f32 %v1351, 0.0
  %v1586 = vmax.f32 %v1356, 0.0
  %v1587 = vmax.f32 %v1359, 0.0
  %v1588 = vmax.f32 %v1364, 0.0
  %v1589 = vmax.f32 %v1367, 0.0
  %v1590 = vmax.f32 %v1372, 0.0
  %v1591 = vmax.f32 %v1375, 0.0
  %v1592 = vmax.f32 %v1380, 0.0
  %v1593 = vmax.f32 %v1383, 0.0
  %v1594 = vmax.f32 %v1388, 0.0
  %v1595 = vmax.f32 %v1391, 0.0
  %v1596 = vmax.f32 %v1396, 0.0
  %v1597 = vmax.f32 %v1399, 0.0
  %v1598 = vmax.f32 %v1404, 0.0
  %v1599 = vmax.f32 %v1407, 0.0
  %v1600 = vmax.f32 %v1412, 0.0
  %v1601 = vmax.f32 %v1415, 0.0
  %v1602 = vmax.f32 %v1420, 0.0
  %v1603 = vmax.f32 %v1423, 0.0
  %v1604 = vmax.f32 %v1428, 0.0
  %v1605 = vmax.f32 %v1431, 0.0
  %v1606 = vmax.f32 %v1436, 0.0
  %v1607 = vmax.f32 %v1439, 0.0
  %v1608 = vmax.f32 %v1444, 0.0
  %v1609 = vmax.f32 %v1447, 0.0
  %v1610 = vmax.f32 %v1452, 0.0
  %v1611 = vmax.f32 %v1455, 0.0
  %v1612 = vmax.f32 %v1460, 0.0
  %v1613 = vmax.f32 %v1463, 0.0
  %v1614 = vmax.f32 %v1468, 0.0
  %v1615 = vmax.f32 %v1471, 0.0
  %v1616 = vmax.f32 %v1476, 0.0
  %v1617 = vmax.f32 %v1479, 0.0
  %v1618 = vmax.f32 %v1484, 0.0
  %v1619 = vmax.f32 %v1487, 0.0
  %v1620 = vmax.f32 %v1492, 0.0
  %v1621 = vmax.f32 %v1495, 0.0
  %v1622 = vmax.f32 %v1500, 0.0
  %v1623 = vmax.f32 %v1503, 0.0
  %v1624 = vmax.f32 %v1508, 0.0
  %v1625 = vmax.f32 %v1511, 0.0
  %v1626 = vmax.f32 %v1516, 0.0
  %v1627 = vmax.f32 %v1519, 0.0
  %v1628 = vmax.f32 %v1524, 0.0
  %v1629 = vmax.f32 %v1527, 0.0
  %v1630 = vmax.f32 %v1532, 0.0
  %v1631 = vmax.f32 %v1535, 0.0
  %v1632 = vmax.f32 %v1540, 0.0
  %v1633 = vmax.f32 %v1543, 0.0
  %v1634 = vmax.f32 %v1548, 0.0
  %v1635 = vmax.f32 %v1551, 0.0
  %v1636 = vmax.f32 %v1556, 0.0
  %v1637 = vmax.f32 %v1559, 0.0
  %v1638 = vmax.f32 %v1564, 0.0
  %v1639 = vmax.f32 %v1567, 0.0
  %v1640 = vmax.f32 %v1572, 0.0
  %v1641 = vmax.f32 %v1575, 0.0
  %v1642 = vpack.c.bf16 %v1579, %v1578
  %v1643 = vpack.c.bf16 %v1581, %v1580
  %v1644 = vpack.c.bf16 %v1583, %v1582
  %v1645 = vpack.c.bf16 %v1585, %v1584
  %v1646 = vpack.c.bf16 %v1587, %v1586
  %v1647 = vpack.c.bf16 %v1589, %v1588
  %v1648 = vpack.c.bf16 %v1591, %v1590
  %v1649 = vpack.c.bf16 %v1593, %v1592
  %v1650 = vpack.c.bf16 %v1595, %v1594
  %v1651 = vpack.c.bf16 %v1597, %v1596
  %v1652 = vpack.c.bf16 %v1599, %v1598
  %v1653 = vpack.c.bf16 %v1601, %v1600
  %v1654 = vpack.c.bf16 %v1603, %v1602
  %v1655 = vpack.c.bf16 %v1605, %v1604
  %v1656 = vpack.c.bf16 %v1607, %v1606
  %v1657 = vpack.c.bf16 %v1609, %v1608
  %v1658 = vpack.c.bf16 %v1611, %v1610
  %v1659 = vpack.c.bf16 %v1613, %v1612
  %v1660 = vpack.c.bf16 %v1615, %v1614
  %v1661 = vpack.c.bf16 %v1617, %v1616
  %v1662 = vpack.c.bf16 %v1619, %v1618
  %v1663 = vpack.c.bf16 %v1621, %v1620
  %v1664 = vpack.c.bf16 %v1623, %v1622
  %v1665 = vpack.c.bf16 %v1625, %v1624
  %v1666 = vpack.c.bf16 %v1627, %v1626
  %v1667 = vpack.c.bf16 %v1629, %v1628
  %v1668 = vpack.c.bf16 %v1631, %v1630
  %v1669 = vpack.c.bf16 %v1633, %v1632
  %v1670 = vpack.c.bf16 %v1635, %v1634
  %v1671 = vpack.c.bf16 %v1637, %v1636
  %v1672 = vpack.c.bf16 %v1639, %v1638
  %v1673 = vpack.c.bf16 %v1641, %v1640
  %v1674 = vld [vmem:[%s7] sm:$0xf]
  %v1675 = vld [vmem:[%s7 + $0x4] sm:$0xf]
  %v1676 = vld [vmem:[%s7 + $0x8] sm:$0xf]
  %v1677 = vld [vmem:[%s7 + $0xc] sm:$0xf]
  %v1678 = vld [vmem:[%s7 + $0x10] sm:$0xf]
  %v1679 = vld [vmem:[%s7 + $0x14] sm:$0xf]
  %v1680 = vld [vmem:[%s7 + $0x18] sm:$0xf]
  %v1681 = vld [vmem:[%s7 + $0x1c] sm:$0xf]
  %v1682 = vld [vmem:[%s7 + $0x20] sm:$0xf]
  %v1683 = vld [vmem:[%s7 + $0x24] sm:$0xf]
  %v1684 = vld [vmem:[%s7 + $0x28] sm:$0xf]
  %v1685 = vld [vmem:[%s7 + $0x2c] sm:$0xf]
  %v1686 = vld [vmem:[%s7 + $0x30] sm:$0xf]
  %v1687 = vld [vmem:[%s7 + $0x34] sm:$0xf]
  %v1688 = vld [vmem:[%s7 + $0x38] sm:$0xf]
  %v1689 = vld [vmem:[%s7 + $0x3c] sm:$0xf]
  %v1690 = vld [vmem:[%s8] sm:$0x1]
  %v1692 = vlaneseq
  %v1693 = vshrl.u32 %v1692, 7
  %v1694 = vsub.s32 0, %v1693
  %v1695 = vrot.slane %v1690, %v1694
  %v1713 = vunpack.c.l.b16 %v1674
  %v1714 = vunpack.c.l.b16 %v1675
  %v1715 = vunpack.c.l.b16 %v1676
  %v1716 = vunpack.c.l.b16 %v1677
  %v1717 = vunpack.c.l.b16 %v1678
  %v1718 = vunpack.c.l.b16 %v1679
  %v1719 = vunpack.c.l.b16 %v1680
  %v1720 = vunpack.c.l.b16 %v1681
  %v1721 = vunpack.c.l.b16 %v1682
  %v1722 = vunpack.c.l.b16 %v1683
  %v1723 = vunpack.c.l.b16 %v1684
  %v1724 = vunpack.c.l.b16 %v1685
  %v1725 = vunpack.c.l.b16 %v1686
  %v1726 = vunpack.c.l.b16 %v1687
  %v1727 = vunpack.c.l.b16 %v1688
  %v1728 = vunpack.c.l.b16 %v1689
  %v1729 = vpack.c.b16 %v1714, %v1713
  %v1730 = vpack.c.b16 %v1716, %v1715
  %v1731 = vpack.c.b16 %v1718, %v1717
  %v1732 = vpack.c.b16 %v1720, %v1719
  %v1733 = vpack.c.b16 %v1722, %v1721
  %v1734 = vpack.c.b16 %v1724, %v1723
  %v1735 = vpack.c.b16 %v1726, %v1725
  %v1736 = vpack.c.b16 %v1728, %v1727
  %1745 = vmatprep.subr.bf16.mxu0 0
  %1746 = vmatpush1.bf16.msra.mxu0 %v1729
  %1747 = vmatprep.subr.bf16.mxu0 0
  %1748 = vmatpush1.bf16.msra.mxu0 %v1730
  %1749 = vmatprep.subr.bf16.mxu0 0
  %1750 = vmatpush1.bf16.msra.mxu0 %v1731
  %1751 = vmatprep.subr.bf16.mxu0 0
  %1752 = vmatpush1.bf16.msra.mxu0 %v1732
  %1753 = vmatprep.subr.bf16.mxu0 0
  %1754 = vmatpush1.bf16.msra.mxu0 %v1733
  %1755 = vmatprep.subr.bf16.mxu0 0
  %1756 = vmatpush1.bf16.msra.mxu0 %v1734
  %1757 = vmatprep.subr.bf16.mxu0 0
  %1758 = vmatpush1.bf16.msra.mxu0 %v1735
  %1759 = vmatprep.subr.bf16.mxu0 0
  %1760 = vmatpush1.bf16.msra.mxu0 %v1736
  %1761 = vmatprep.subr.bf16.mxu0 0
  %1762 = vmatpush1.bf16.msra.mxu0 0
  %1763 = vmatprep.subr.bf16.mxu0 0
  %1764 = vmatpush1.bf16.msra.mxu0 0
  %1765 = vmatprep.subr.bf16.mxu0 0
  %1766 = vmatpush1.bf16.msra.mxu0 0
  %1767 = vmatprep.subr.bf16.mxu0 0
  %1768 = vmatpush1.bf16.msra.mxu0 0
  %1769 = vmatprep.subr.bf16.mxu0 0
  %1770 = vmatpush1.bf16.msra.mxu0 0
  %1771 = vmatprep.subr.bf16.mxu0 0
  %1772 = vmatpush1.bf16.msra.mxu0 0
  %1773 = vmatprep.subr.bf16.mxu0 0
  %1774 = vmatpush1.bf16.msra.mxu0 0
  %1775 = vmatprep.subr.bf16.mxu0 0
  %1776 = vmatpush1.bf16.msra.mxu0 0
  %1777 = vmatprep.mubr.bf16.mxu0 0
  %1778 = vmatmul.mubr.bf16.gmra.mrb[0].mxu0 %v1642
  %v1779 = vpop.f32.mrb[0].mxu0
  %v1780 = vadd.f32 %v1695, %v1779
  %v1781 = vpop.f32.mrb[0].mxu0
  %v1782 = vpop.f32.mrb[0].mxu0
  %v1783 = vadd.f32 %v1695, %v1782
  %v1784 = vpop.f32.mrb[0].mxu0
  %1785 = vmatprep.mubr.bf16.mxu0 0
  %1786 = vmatmul.mubr.bf16.gmra.mrb[0].mxu0 %v1643
  %v1787 = vpop.f32.mrb[0].mxu0
  %v1788 = vadd.f32 %v1695, %v1787
  %v1789 = vpop.f32.mrb[0].mxu0
  %v1790 = vpop.f32.mrb[0].mxu0
  %v1791 = vadd.f32 %v1695, %v1790
  %v1792 = vpop.f32.mrb[0].mxu0
  %1793 = vmatprep.mubr.bf16.mxu0 0
  %1794 = vmatmul.mubr.bf16.gmra.mrb[0].mxu0 %v1644
  %v1795 = vpop.f32.mrb[0].mxu0
  %v1796 = vadd.f32 %v1695, %v1795
  %v1797 = vpop.f32.mrb[0].mxu0
  %v1798 = vpop.f32.mrb[0].mxu0
  %v1799 = vadd.f32 %v1695, %v1798
  %v1800 = vpop.f32.mrb[0].mxu0
  %1801 = vmatprep.mubr.bf16.mxu0 0
  %1802 = vmatmul.mubr.bf16.gmra.mrb[0].mxu0 %v1645
  %v1803 = vpop.f32.mrb[0].mxu0
  %v1804 = vadd.f32 %v1695, %v1803
  %v1805 = vpop.f32.mrb[0].mxu0
  %v1806 = vpop.f32.mrb[0].mxu0
  %v1807 = vadd.f32 %v1695, %v1806
  %v1808 = vpop.f32.mrb[0].mxu0
  %1809 = vmatprep.mubr.bf16.mxu0 0
  %1810 = vmatmul.mubr.bf16.gmra.mrb[0].mxu0 %v1646
  %v1811 = vpop.f32.mrb[0].mxu0
  %v1812 = vadd.f32 %v1695, %v1811
  %v1813 = vpop.f32.mrb[0].mxu0
  %v1814 = vpop.f32.mrb[0].mxu0
  %v1815 = vadd.f32 %v1695, %v1814
  %v1816 = vpop.f32.mrb[0].mxu0
  %1817 = vmatprep.mubr.bf16.mxu0 0
  %1818 = vmatmul.mubr.bf16.gmra.mrb[0].mxu0 %v1647
  %v1819 = vpop.f32.mrb[0].mxu0
  %v1820 = vadd.f32 %v1695, %v1819
  %v1821 = vpop.f32.mrb[0].mxu0
  %v1822 = vpop.f32.mrb[0].mxu0
  %v1823 = vadd.f32 %v1695, %v1822
  %v1824 = vpop.f32.mrb[0].mxu0
  %1825 = vmatprep.mubr.bf16.mxu0 0
  %1826 = vmatmul.mubr.bf16.gmra.mrb[0].mxu0 %v1648
  %v1827 = vpop.f32.mrb[0].mxu0
  %v1828 = vadd.f32 %v1695, %v1827
  %v1829 = vpop.f32.mrb[0].mxu0
  %v1830 = vpop.f32.mrb[0].mxu0
  %v1831 = vadd.f32 %v1695, %v1830
  %v1832 = vpop.f32.mrb[0].mxu0
  %1833 = vmatprep.mubr.bf16.mxu0 0
  %1834 = vmatmul.mubr.bf16.gmra.mrb[0].mxu0 %v1649
  %v1835 = vpop.f32.mrb[0].mxu0
  %v1836 = vadd.f32 %v1695, %v1835
  %v1837 = vpop.f32.mrb[0].mxu0
  %v1838 = vpop.f32.mrb[0].mxu0
  %v1839 = vadd.f32 %v1695, %v1838
  %v1840 = vpop.f32.mrb[0].mxu0
  %1841 = vmatprep.mubr.bf16.mxu0 0
  %1842 = vmatmul.mubr.bf16.gmra.mrb[0].mxu0 %v1650
  %v1843 = vpop.f32.mrb[0].mxu0
  %v1844 = vadd.f32 %v1695, %v1843
  %v1845 = vpop.f32.mrb[0].mxu0
  %v1846 = vpop.f32.mrb[0].mxu0
  %v1847 = vadd.f32 %v1695, %v1846
  %v1848 = vpop.f32.mrb[0].mxu0
  %1849 = vmatprep.mubr.bf16.mxu0 0
  %1850 = vmatmul.mubr.bf16.gmra.mrb[0].mxu0 %v1651
  %v1851 = vpop.f32.mrb[0].mxu0
  %v1852 = vadd.f32 %v1695, %v1851
  %v1853 = vpop.f32.mrb[0].mxu0
  %v1854 = vpop.f32.mrb[0].mxu0
  %v1855 = vadd.f32 %v1695, %v1854
  %v1856 = vpop.f32.mrb[0].mxu0
  %1857 = vmatprep.mubr.bf16.mxu0 0
  %1858 = vmatmul.mubr.bf16.gmra.mrb[0].mxu0 %v1652
  %v1859 = vpop.f32.mrb[0].mxu0
  %v1860 = vadd.f32 %v1695, %v1859
  %v1861 = vpop.f32.mrb[0].mxu0
  %v1862 = vpop.f32.mrb[0].mxu0
  %v1863 = vadd.f32 %v1695, %v1862
  %v1864 = vpop.f32.mrb[0].mxu0
  %1865 = vmatprep.mubr.bf16.mxu0 0
  %1866 = vmatmul.mubr.bf16.gmra.mrb[0].mxu0 %v1653
  %v1867 = vpop.f32.mrb[0].mxu0
  %v1868 = vadd.f32 %v1695, %v1867
  %v1869 = vpop.f32.mrb[0].mxu0
  %v1870 = vpop.f32.mrb[0].mxu0
  %v1871 = vadd.f32 %v1695, %v1870
  %v1872 = vpop.f32.mrb[0].mxu0
  %1873 = vmatprep.mubr.bf16.mxu0 0
  %1874 = vmatmul.mubr.bf16.gmra.mrb[0].mxu0 %v1654
  %v1875 = vpop.f32.mrb[0].mxu0
  %v1876 = vadd.f32 %v1695, %v1875
  %v1877 = vpop.f32.mrb[0].mxu0
  %v1878 = vpop.f32.mrb[0].mxu0
  %v1879 = vadd.f32 %v1695, %v1878
  %v1880 = vpop.f32.mrb[0].mxu0
  %1881 = vmatprep.mubr.bf16.mxu0 0
  %1882 = vmatmul.mubr.bf16.gmra.mrb[0].mxu0 %v1655
  %v1883 = vpop.f32.mrb[0].mxu0
  %v1884 = vadd.f32 %v1695, %v1883
  %v1885 = vpop.f32.mrb[0].mxu0
  %v1886 = vpop.f32.mrb[0].mxu0
  %v1887 = vadd.f32 %v1695, %v1886
  %v1888 = vpop.f32.mrb[0].mxu0
  %1889 = vmatprep.mubr.bf16.mxu0 0
  %1890 = vmatmul.mubr.bf16.gmra.mrb[0].mxu0 %v1656
  %v1891 = vpop.f32.mrb[0].mxu0
  %v1892 = vadd.f32 %v1695, %v1891
  %v1893 = vpop.f32.mrb[0].mxu0
  %v1894 = vpop.f32.mrb[0].mxu0
  %v1895 = vadd.f32 %v1695, %v1894
  %v1896 = vpop.f32.mrb[0].mxu0
  %1897 = vmatprep.mubr.bf16.mxu0 0
  %1898 = vmatmul.mubr.bf16.gmra.mrb[0].mxu0 %v1657
  %v1899 = vpop.f32.mrb[0].mxu0
  %v1900 = vadd.f32 %v1695, %v1899
  %v1901 = vpop.f32.mrb[0].mxu0
  %v1902 = vpop.f32.mrb[0].mxu0
  %v1903 = vadd.f32 %v1695, %v1902
  %v1904 = vpop.f32.mrb[0].mxu0
  %1905 = vmatprep.mubr.bf16.mxu0 0
  %1906 = vmatmul.mubr.bf16.gmra.mrb[0].mxu0 %v1658
  %v1907 = vpop.f32.mrb[0].mxu0
  %v1908 = vadd.f32 %v1695, %v1907
  %v1909 = vpop.f32.mrb[0].mxu0
  %v1910 = vpop.f32.mrb[0].mxu0
  %v1911 = vadd.f32 %v1695, %v1910
  %v1912 = vpop.f32.mrb[0].mxu0
  %1913 = vmatprep.mubr.bf16.mxu0 0
  %1914 = vmatmul.mubr.bf16.gmra.mrb[0].mxu0 %v1659
  %v1915 = vpop.f32.mrb[0].mxu0
  %v1916 = vadd.f32 %v1695, %v1915
  %v1917 = vpop.f32.mrb[0].mxu0
  %v1918 = vpop.f32.mrb[0].mxu0
  %v1919 = vadd.f32 %v1695, %v1918
  %v1920 = vpop.f32.mrb[0].mxu0
  %1921 = vmatprep.mubr.bf16.mxu0 0
  %1922 = vmatmul.mubr.bf16.gmra.mrb[0].mxu0 %v1660
  %v1923 = vpop.f32.mrb[0].mxu0
  %v1924 = vadd.f32 %v1695, %v1923
  %v1925 = vpop.f32.mrb[0].mxu0
  %v1926 = vpop.f32.mrb[0].mxu0
  %v1927 = vadd.f32 %v1695, %v1926
  %v1928 = vpop.f32.mrb[0].mxu0
  %1929 = vmatprep.mubr.bf16.mxu0 0
  %1930 = vmatmul.mubr.bf16.gmra.mrb[0].mxu0 %v1661
  %v1931 = vpop.f32.mrb[0].mxu0
  %v1932 = vadd.f32 %v1695, %v1931
  %v1933 = vpop.f32.mrb[0].mxu0
  %v1934 = vpop.f32.mrb[0].mxu0
  %v1935 = vadd.f32 %v1695, %v1934
  %v1936 = vpop.f32.mrb[0].mxu0
  %1937 = vmatprep.mubr.bf16.mxu0 0
  %1938 = vmatmul.mubr.bf16.gmra.mrb[0].mxu0 %v1662
  %v1939 = vpop.f32.mrb[0].mxu0
  %v1940 = vadd.f32 %v1695, %v1939
  %v1941 = vpop.f32.mrb[0].mxu0
  %v1942 = vpop.f32.mrb[0].mxu0
  %v1943 = vadd.f32 %v1695, %v1942
  %v1944 = vpop.f32.mrb[0].mxu0
  %1945 = vmatprep.mubr.bf16.mxu0 0
  %1946 = vmatmul.mubr.bf16.gmra.mrb[0].mxu0 %v1663
  %v1947 = vpop.f32.mrb[0].mxu0
  %v1948 = vadd.f32 %v1695, %v1947
  %v1949 = vpop.f32.mrb[0].mxu0
  %v1950 = vpop.f32.mrb[0].mxu0
  %v1951 = vadd.f32 %v1695, %v1950
  %v1952 = vpop.f32.mrb[0].mxu0
  %1953 = vmatprep.mubr.bf16.mxu0 0
  %1954 = vmatmul.mubr.bf16.gmra.mrb[0].mxu0 %v1664
  %v1955 = vpop.f32.mrb[0].mxu0
  %v1956 = vadd.f32 %v1695, %v1955
  %v1957 = vpop.f32.mrb[0].mxu0
  %v1958 = vpop.f32.mrb[0].mxu0
  %v1959 = vadd.f32 %v1695, %v1958
  %v1960 = vpop.f32.mrb[0].mxu0
  %1961 = vmatprep.mubr.bf16.mxu0 0
  %1962 = vmatmul.mubr.bf16.gmra.mrb[0].mxu0 %v1665
  %v1963 = vpop.f32.mrb[0].mxu0
  %v1964 = vadd.f32 %v1695, %v1963
  %v1965 = vpop.f32.mrb[0].mxu0
  %v1966 = vpop.f32.mrb[0].mxu0
  %v1967 = vadd.f32 %v1695, %v1966
  %v1968 = vpop.f32.mrb[0].mxu0
  %1969 = vmatprep.mubr.bf16.mxu0 0
  %1970 = vmatmul.mubr.bf16.gmra.mrb[0].mxu0 %v1666
  %v1971 = vpop.f32.mrb[0].mxu0
  %v1972 = vadd.f32 %v1695, %v1971
  %v1973 = vpop.f32.mrb[0].mxu0
  %v1974 = vpop.f32.mrb[0].mxu0
  %v1975 = vadd.f32 %v1695, %v1974
  %v1976 = vpop.f32.mrb[0].mxu0
  %1977 = vmatprep.mubr.bf16.mxu0 0
  %1978 = vmatmul.mubr.bf16.gmra.mrb[0].mxu0 %v1667
  %v1979 = vpop.f32.mrb[0].mxu0
  %v1980 = vadd.f32 %v1695, %v1979
  %v1981 = vpop.f32.mrb[0].mxu0
  %v1982 = vpop.f32.mrb[0].mxu0
  %v1983 = vadd.f32 %v1695, %v1982
  %v1984 = vpop.f32.mrb[0].mxu0
  %1985 = vmatprep.mubr.bf16.mxu0 0
  %1986 = vmatmul.mubr.bf16.gmra.mrb[0].mxu0 %v1668
  %v1987 = vpop.f32.mrb[0].mxu0
  %v1988 = vadd.f32 %v1695, %v1987
  %v1989 = vpop.f32.mrb[0].mxu0
  %v1990 = vpop.f32.mrb[0].mxu0
  %v1991 = vadd.f32 %v1695, %v1990
  %v1992 = vpop.f32.mrb[0].mxu0
  %1993 = vmatprep.mubr.bf16.mxu0 0
  %1994 = vmatmul.mubr.bf16.gmra.mrb[0].mxu0 %v1669
  %v1995 = vpop.f32.mrb[0].mxu0
  %v1996 = vadd.f32 %v1695, %v1995
  %v1997 = vpop.f32.mrb[0].mxu0
  %v1998 = vpop.f32.mrb[0].mxu0
  %v1999 = vadd.f32 %v1695, %v1998
  %v2000 = vpop.f32.mrb[0].mxu0
  %2001 = vmatprep.mubr.bf16.mxu0 0
  %2002 = vmatmul.mubr.bf16.gmra.mrb[0].mxu0 %v1670
  %v2003 = vpop.f32.mrb[0].mxu0
  %v2004 = vadd.f32 %v1695, %v2003
  %v2005 = vpop.f32.mrb[0].mxu0
  %v2006 = vpop.f32.mrb[0].mxu0
  %v2007 = vadd.f32 %v1695, %v2006
  %v2008 = vpop.f32.mrb[0].mxu0
  %2009 = vmatprep.mubr.bf16.mxu0 0
  %2010 = vmatmul.mubr.bf16.gmra.mrb[0].mxu0 %v1671
  %v2011 = vpop.f32.mrb[0].mxu0
  %v2012 = vadd.f32 %v1695, %v2011
  %v2013 = vpop.f32.mrb[0].mxu0
  %v2014 = vpop.f32.mrb[0].mxu0
  %v2015 = vadd.f32 %v1695, %v2014
  %v2016 = vpop.f32.mrb[0].mxu0
  %2017 = vmatprep.mubr.bf16.mxu0 0
  %2018 = vmatmul.mubr.bf16.gmra.mrb[0].mxu0 %v1672
  %v2019 = vpop.f32.mrb[0].mxu0
  %v2020 = vadd.f32 %v1695, %v2019
  %v2021 = vpop.f32.mrb[0].mxu0
  %v2022 = vpop.f32.mrb[0].mxu0
  %v2023 = vadd.f32 %v1695, %v2022
  %v2024 = vpop.f32.mrb[0].mxu0
  %2025 = vmatprep.mubr.bf16.mxu0 0
  %2026 = vmatmul.mubr.bf16.gmra.mrb[0].mxu0 %v1673
  %v2027 = vpop.f32.mrb[0].mxu0
  %v2028 = vadd.f32 %v1695, %v2027
  %v2029 = vpop.f32.mrb[0].mxu0
  %v2030 = vpop.f32.mrb[0].mxu0
  %v2031 = vadd.f32 %v1695, %v2030
  %v2032 = vpop.f32.mrb[0].mxu0
  %2033 = vdwg.mxu0
  %vm2034 = vcmask 130048
  %2035 = vst.msk [vmem:[%s9] sm:$0xff] %vm2034, %v1780
  %2036 = vst.msk [vmem:[%s9 + $0x8] sm:$0xff] %vm2034, %v1783
  %2037 = vst.msk [vmem:[%s9 + $0x10] sm:$0xff] %vm2034, %v1788
  %2038 = vst.msk [vmem:[%s9 + $0x18] sm:$0xff] %vm2034, %v1791
  %2039 = vst.msk [vmem:[%s9 + $0x20] sm:$0xff] %vm2034, %v1796
  %2040 = vst.msk [vmem:[%s9 + $0x28] sm:$0xff] %vm2034, %v1799
  %2041 = vst.msk [vmem:[%s9 + $0x30] sm:$0xff] %vm2034, %v1804
  %2042 = vst.msk [vmem:[%s9 + $0x38] sm:$0xff] %vm2034, %v1807
  %2043 = vst.msk [vmem:[%s9 + $0x40] sm:$0xff] %vm2034, %v1812
  %2044 = vst.msk [vmem:[%s9 + $0x48] sm:$0xff] %vm2034, %v1815
  %2045 = vst.msk [vmem:[%s9 + $0x50] sm:$0xff] %vm2034, %v1820
  %2046 = vst.msk [vmem:[%s9 + $0x58] sm:$0xff] %vm2034, %v1823
  %2047 = vst.msk [vmem:[%s9 + $0x60] sm:$0xff] %vm2034, %v1828
  %2048 = vst.msk [vmem:[%s9 + $0x68] sm:$0xff] %vm2034, %v1831
  %2049 = vst.msk [vmem:[%s9 + $0x70] sm:$0xff] %vm2034, %v1836
  %2050 = vst.msk [vmem:[%s9 + $0x78] sm:$0xff] %vm2034, %v1839
  %2051 = vst.msk [vmem:[%s9 + $0x80] sm:$0xff] %vm2034, %v1844
  %2052 = vst.msk [vmem:[%s9 + $0x88] sm:$0xff] %vm2034, %v1847
  %2053 = vst.msk [vmem:[%s9 + $0x90] sm:$0xff] %vm2034, %v1852
  %2054 = vst.msk [vmem:[%s9 + $0x98] sm:$0xff] %vm2034, %v1855
  %2055 = vst.msk [vmem:[%s9 + $0xa0] sm:$0xff] %vm2034, %v1860
  %2056 = vst.msk [vmem:[%s9 + $0xa8] sm:$0xff] %vm2034, %v1863
  %2057 = vst.msk [vmem:[%s9 + $0xb0] sm:$0xff] %vm2034, %v1868
  %2058 = vst.msk [vmem:[%s9 + $0xb8] sm:$0xff] %vm2034, %v1871
  %2059 = vst.msk [vmem:[%s9 + $0xc0] sm:$0xff] %vm2034, %v1876
  %2060 = vst.msk [vmem:[%s9 + $0xc8] sm:$0xff] %vm2034, %v1879
  %2061 = vst.msk [vmem:[%s9 + $0xd0] sm:$0xff] %vm2034, %v1884
  %2062 = vst.msk [vmem:[%s9 + $0xd8] sm:$0xff] %vm2034, %v1887
  %2063 = vst.msk [vmem:[%s9 + $0xe0] sm:$0xff] %vm2034, %v1892
  %2064 = vst.msk [vmem:[%s9 + $0xe8] sm:$0xff] %vm2034, %v1895
  %2065 = vst.msk [vmem:[%s9 + $0xf0] sm:$0xff] %vm2034, %v1900
  %2066 = vst.msk [vmem:[%s9 + $0xf8] sm:$0xff] %vm2034, %v1903
  %2067 = vst.msk [vmem:[%s9 + $0x100] sm:$0xff] %vm2034, %v1908
  %2068 = vst.msk [vmem:[%s9 + $0x108] sm:$0xff] %vm2034, %v1911
  %2069 = vst.msk [vmem:[%s9 + $0x110] sm:$0xff] %vm2034, %v1916
  %2070 = vst.msk [vmem:[%s9 + $0x118] sm:$0xff] %vm2034, %v1919
  %2071 = vst.msk [vmem:[%s9 + $0x120] sm:$0xff] %vm2034, %v1924
  %2072 = vst.msk [vmem:[%s9 + $0x128] sm:$0xff] %vm2034, %v1927
  %2073 = vst.msk [vmem:[%s9 + $0x130] sm:$0xff] %vm2034, %v1932
  %2074 = vst.msk [vmem:[%s9 + $0x138] sm:$0xff] %vm2034, %v1935
  %2075 = vst.msk [vmem:[%s9 + $0x140] sm:$0xff] %vm2034, %v1940
  %2076 = vst.msk [vmem:[%s9 + $0x148] sm:$0xff] %vm2034, %v1943
  %2077 = vst.msk [vmem:[%s9 + $0x150] sm:$0xff] %vm2034, %v1948
  %2078 = vst.msk [vmem:[%s9 + $0x158] sm:$0xff] %vm2034, %v1951
  %2079 = vst.msk [vmem:[%s9 + $0x160] sm:$0xff] %vm2034, %v1956
  %2080 = vst.msk [vmem:[%s9 + $0x168] sm:$0xff] %vm2034, %v1959
  %2081 = vst.msk [vmem:[%s9 + $0x170] sm:$0xff] %vm2034, %v1964
  %2082 = vst.msk [vmem:[%s9 + $0x178] sm:$0xff] %vm2034, %v1967
  %2083 = vst.msk [vmem:[%s9 + $0x180] sm:$0xff] %vm2034, %v1972
  %2084 = vst.msk [vmem:[%s9 + $0x188] sm:$0xff] %vm2034, %v1975
  %2085 = vst.msk [vmem:[%s9 + $0x190] sm:$0xff] %vm2034, %v1980
  %2086 = vst.msk [vmem:[%s9 + $0x198] sm:$0xff] %vm2034, %v1983
  %2087 = vst.msk [vmem:[%s9 + $0x1a0] sm:$0xff] %vm2034, %v1988
  %2088 = vst.msk [vmem:[%s9 + $0x1a8] sm:$0xff] %vm2034, %v1991
  %2089 = vst.msk [vmem:[%s9 + $0x1b0] sm:$0xff] %vm2034, %v1996
  %2090 = vst.msk [vmem:[%s9 + $0x1b8] sm:$0xff] %vm2034, %v1999
  %2091 = vst.msk [vmem:[%s9 + $0x1c0] sm:$0xff] %vm2034, %v2004
  %2092 = vst.msk [vmem:[%s9 + $0x1c8] sm:$0xff] %vm2034, %v2007
  %2093 = vst.msk [vmem:[%s9 + $0x1d0] sm:$0xff] %vm2034, %v2012
  %2094 = vst.msk [vmem:[%s9 + $0x1d8] sm:$0xff] %vm2034, %v2015
  %2095 = vst.msk [vmem:[%s9 + $0x1e0] sm:$0xff] %vm2034, %v2020
  %2096 = vst.msk [vmem:[%s9 + $0x1e8] sm:$0xff] %vm2034, %v2023
  %2097 = vst.msk [vmem:[%s9 + $0x1f0] sm:$0xff] %vm2034, %v2028
  %2098 = vst.msk [vmem:[%s9 + $0x1f8] sm:$0xff] %vm2034, %v2031
  // Predicated region
  $region38: #{tpu_custom_call.1} parent=0 // pred_check
    _
  $region39: #{tpu_custom_call.1} parent=0 // pred_check_branch
    %2100 = sbr.rel (0) target = $region41
  $region40: #{tpu_custom_call.1} parent=0 // pred_region
    _
  $region41: #{tpu_custom_call.1} parent=0 // pred_fallthru
    _
  // Predicated region
  $region42: #{tpu_custom_call.1} parent=0 // pred_check
    _
  $region43: #{tpu_custom_call.1} parent=0 // pred_check_branch
    %2102 = sbr.rel (0) target = $region45
  $region44: #{tpu_custom_call.1} parent=0 // pred_region
    _
  $region45: #{tpu_custom_call.1} parent=0 // pred_fallthru
    _

</llo_original>
